<compile_context>
chip_gen: v7x
topology: tpu7x:2x2x1
jax: 0.10.0
libtpu: 0.0.40
codegen_flags: <defaults>
</compile_context>

<pallas_src>
import math

import jax
import jax.numpy as jnp
from jax import lax
from jax.experimental import pallas as pl
from jax.experimental.pallas import tpu as pltpu

# ------------- static config: Encoder_last(dim_seq=16, dim_fea=32, n_heads=2, hidden=64)
BATCH = 2
SEQ = 16                              # dim_seq (== conv kernel height)
D_MODEL = 32                          # dim_fea
N_HEADS = 2
HIDDEN = 64                           # accepted by the module, unused by Feed_Forward

DIM_K = D_MODEL // N_HEADS            # 16
DIM_V = DIM_K                         # 16
D_HEAD = DIM_K // N_HEADS             # 8   (dim of the PyTorch raw-reshape "heads")
N_SLICE = N_HEADS * BATCH             # 4 merged (head, batch) attention blocks
ROWS_PER_SLICE = SEQ // N_HEADS       # 8 flat rows of the (B*S, DIM_K) array per block
N_TOK = BATCH * SEQ                   # 32 flat token rows
STACK = N_HEADS * N_TOK               # 64 stacked (piece, flat-row) attention rows

F1 = 16                               # conv output channels (Feed_Forward default)
KH, KW = 16, 16                       # conv kernel
N_PATCH = D_MODEL // KW               # 2 horizontal patches
OUT_FEATS = F1 * N_PATCH              # 32 flattened conv features per batch row
CONV_COLS = F1 * N_PATCH * KH         # 512 columns of the first conv matmul

NORM_FACT = 1.0 / math.sqrt(D_MODEL)  # PyTorch uses 1/sqrt(d_model)
LN_EPS = 1e-5
NEG_INF = -1e30                       # stand-in for float('-inf')
# TODO(synk): degenerate rows (every score == row mean) give uniform attention
# here; PyTorch's float('-inf') fill would produce NaN for such rows.

assert DIM_K % N_HEADS == 0 and SEQ % N_HEADS == 0
assert SEQ == KH and D_MODEL % KW == 0


# --------------------------------------------------------------------------- kernel
def encoder_last_kernel(x_ref, wqkv_ref, bqkv_ref, wo_ref, bo_ref,
                        amult_ref, abias_ref,
                        wconv_ref, gsum_ref, ssum_ref, dmask_ref, bconv_ref,
                        out_ref):
    f32 = jnp.float32
    x = x_ref[...]                                                     # (32, 32)

    # ---- fused QKV projection, one matmul per head-piece.  1/sqrt(d_model) is
    # pre-folded into the Q columns of wqkv/bqkv (scores unchanged, mask/softmax
    # see exactly the reference values).  Rows 0..31 = piece 0, 32..63 = piece 1.
    h0 = jnp.dot(x, wqkv_ref[0], preferred_element_type=f32) + bqkv_ref[0]   # (32, 24)
    h1 = jnp.dot(x, wqkv_ref[1], preferred_element_type=f32) + bqkv_ref[1]   # (32, 24)
    qkv = jnp.concatenate([h0, h1], axis=0)                            # (64, 24)
    q = qkv[:, 0:D_HEAD]                                               # (64, 8), scaled
    k = qkv[:, D_HEAD:2 * D_HEAD]                                      # (64, 8)
    v = qkv[:, 2 * D_HEAD:3 * D_HEAD]                                  # (64, 8)

    # ---- all 4 (head, batch) attention blocks as ONE (64,64) masked problem.
    # amult is 1 inside a 16-key block and 0 outside; abias is 0 inside, -1e30
    # outside.  Per-row threshold = mean over the 16 in-block scores.
    s = lax.dot_general(q, k, (((1,), (1,)), ((), ())),
                        preferred_element_type=f32)                    # (64, 64)
    s_in = s * amult_ref[...]                                          # off-block -> 0
    thre = jnp.sum(s_in, axis=-1, keepdims=True) * (1.0 / SEQ)         # block-row mean
    s_cand = s_in + abias_ref[...]                                     # off-block -> -1e30
    s_m = jnp.where(s_cand > thre, s_cand, NEG_INF)                    # mean-threshold mask
    m = jnp.max(s_m, axis=-1, keepdims=True)
    e = jnp.exp(s_m - m)                                               # masked -> exactly 0
    p_attn = e * pl.reciprocal(jnp.sum(e, axis=-1, keepdims=True), approx=True)
    o = jnp.dot(p_attn, v, preferred_element_type=f32)                 # (64, 8)

    # ---- output projection with the raw-reshape un-permute folded into Wo:
    # top 32 rows of o are output columns 0..7, bottom 32 rows are columns 8..15.
    sub = (jnp.dot(o[0:N_TOK, :], wo_ref[0], preferred_element_type=f32)
           + jnp.dot(o[N_TOK:STACK, :], wo_ref[1], preferred_element_type=f32)
           + bo_ref[...])                                              # (32, 32)

    # ---- Add & LayerNorm.  Dropout == identity (eval); the LN affine (ln_w,
    # ln_b) is folded into wconv/bconv in the wrapper.
    # TODO(synk): nn.Dropout(config.p) has no inference-time effect; not modeled.
    y = x + sub
    mu = jnp.mean(y, axis=-1, keepdims=True)
    var = jnp.mean(jnp.square(y - mu), axis=-1, keepdims=True)
    yn = (y - mu) * lax.rsqrt(var + LN_EPS)                            # (32, 32)

    # ---- Feed_Forward: Conv2d(1, F1, (16,16), stride 16, no bias) + ReLU + flatten.
    #   t[r, f*32+p*16+i] = sum_j yn[r, p*16+j] * wconv[f, i, j] * ln_w[p*16+j]
    #   dmask keeps only i == r%16 (the conv row that matches this token row),
    #   gsum sums each 16-lane group -> columns ordered f*2+p (torch flatten),
    #   ssum sums the 16 token rows of each batch.
    t = jnp.dot(yn, wconv_ref[...], preferred_element_type=f32)        # (32, 512)
    t = t * dmask_ref[...]                                             # diagonal select
    r = jnp.dot(t, gsum_ref[...], preferred_element_type=f32)          # (32, 32)
    out = jnp.dot(ssum_ref[...], r, preferred_element_type=f32) + bconv_ref[...]  # (2, 32)
    out_ref[...] = jnp.maximum(out, 0.0)                               # GELU-class == ReLU


# --------------------------------------------------------------------------- one-time prep
def prepare_params(p):
    """One-time folding of the module parameters into kernel operands."""
    f32 = jnp.float32

    # (a) fold 1/sqrt(d_model) into the Q projection (scores identical to reference)
    wq_s = p['wq'] * NORM_FACT
    bq_s = p['bq'] * NORM_FACT

    def piece(w, pc):
        return w[:, pc * D_HEAD:(pc + 1) * D_HEAD]

    wqkv = jnp.stack([jnp.concatenate([piece(wq_s, pc), piece(p['wk'], pc),
                                       piece(p['wv'], pc)], axis=1)
                      for pc in range(N_HEADS)], axis=0)               # (2, 32, 24)
    bqkv = jnp.stack([jnp.concatenate([piece(bq_s, pc), piece(p['bk'], pc),
                                       piece(p['bv'], pc)], axis=1)
                      for pc in range(N_HEADS)], axis=0)               # (2, 1, 24)
    wo = jnp.stack([p['wo'][0:D_HEAD, :], p['wo'][D_HEAD:DIM_V, :]], axis=0)  # (2, 8, 32)

    # (b) block-structure masks for the fused (64,64) attention
    g = (jnp.arange(STACK) // ROWS_PER_SLICE) % N_SLICE
    amult = (g[:, None] == g[None, :]).astype(f32)                     # 1 in-block, 0 off
    abias = (amult - 1.0) * 1e30                                       # 0 in-block, -1e30 off

    # (c) conv-as-matmul weights with the LayerNorm affine folded in:
    #   wconv_mat[c, f*32 + q*16 + i] = wconv[f, i, c - q*16] * ln_w[c]  (c in patch q)
    lnw = p['ln_w'].reshape(-1)
    lnb = p['ln_b'].reshape(-1)
    eye_p = jnp.eye(N_PATCH, dtype=f32)
    w6 = jnp.einsum('fij,pq->pjfqi', p['wconv'], eye_p)                # (2,16,16,2,16)
    wconv_mat = w6.reshape(N_PATCH * KW, CONV_COLS) * lnw[:, None]     # (32, 512)
    gsum = jnp.repeat(jnp.eye(OUT_FEATS, dtype=f32), KH, axis=0)       # (512, 32)
    ssum = jnp.repeat(jnp.eye(BATCH, dtype=f32), SEQ, axis=1)          # (2, 32)
    ridx = jnp.arange(N_TOK) % SEQ
    cidx = jnp.arange(CONV_COLS) % KH
    dmask = (ridx[:, None] == cidx[None, :]).astype(f32)               # (32, 512)
    bconv = jnp.einsum('fij,pj->fp', p['wconv'],
                       lnb.reshape(N_PATCH, KW)).reshape(1, OUT_FEATS)  # (1, 32)

    return dict(wqkv=wqkv, bqkv=bqkv, wo=wo, bo=p['bo'],
                amult=amult, abias=abias,
                wconv_mat=wconv_mat, gsum=gsum, ssum=ssum, dmask=dmask, bconv=bconv)


# --------------------------------------------------------------------------- wrapper
@jax.jit
def encoder_last_forward(x, kp):
    b, s, d = x.shape
    x2d = x.reshape(b * s, d)

    operands = (x2d, kp['wqkv'], kp['bqkv'], kp['wo'], kp['bo'],
                kp['amult'], kp['abias'],
                kp['wconv_mat'], kp['gsum'], kp['ssum'], kp['dmask'], kp['bconv'])

    flops = (2 * 2 * N_TOK * D_MODEL * (3 * D_HEAD)      # fused QKV projection
             + 2 * STACK * D_HEAD * STACK                # QK^T
             + 2 * STACK * STACK * D_HEAD                # P @ V
             + 2 * 2 * N_TOK * D_HEAD * D_MODEL          # output projection
             + 2 * N_TOK * D_MODEL * CONV_COLS           # conv matmul
             + 2 * N_TOK * CONV_COLS * OUT_FEATS         # lane-group reduce
             + 2 * BATCH * N_TOK * OUT_FEATS)            # sublane-group reduce
    cost = pl.CostEstimate(
        flops=flops,
        transcendentals=STACK * STACK + N_TOK + STACK,
        bytes_accessed=4 * (sum(op.size for op in operands) + b * OUT_FEATS))

    vmem = pl.BlockSpec(memory_space=pltpu.MemorySpace.VMEM)
    return pl.pallas_call(
        encoder_last_kernel,
        out_shape=jax.ShapeDtypeStruct((b, OUT_FEATS), jnp.float32),
        in_specs=[vmem] * len(operands),
        out_specs=vmem,
        cost_estimate=cost,
    )(*operands)


# --------------------------------------------------------------------------- reference
def reference_forward(x, p):
    """Pure-JAX transcription of the PyTorch module (sanity check)."""
    b, s, d = x.shape
    q = x @ p['wq'] + p['bq']
    k = x @ p['wk'] + p['bk']
    v = x @ p['wv'] + p['bv']
    Q = q.reshape(-1, b, s, D_HEAD)                       # raw row-major reshapes
    K = k.reshape(-1, b, s, D_HEAD)
    V = v.reshape(-1, b, s, D_HEAD)
    score = jnp.einsum('gbqd,gbkd->gbqk', Q, K) * NORM_FACT
    thre = jnp.mean(score, axis=-1, keepdims=True)
    score = jnp.where(score > thre, score, NEG_INF)
    attn = jax.nn.softmax(score, axis=-1)
    o = jnp.einsum('gbqk,gbkd->gbqd', attn, V).reshape(b, s, DIM_V)
    sub = o @ p['wo'] + p['bo']
    y = x + sub
    mu = y.mean(-1, keepdims=True)
    var = ((y - mu) ** 2).mean(-1, keepdims=True)
    y = (y - mu) / jnp.sqrt(var + LN_EPS) * p['ln_w'] + p['ln_b']
    cos = []
    for pp in range(N_PATCH):
        patch = y[:, :, pp * KW:(pp + 1) * KW]            # (B, 16, 16)
        cos.append(jnp.einsum('bij,fij->bf', patch, p['wconv']))
    co = jnp.maximum(jnp.stack(cos, axis=-1), 0.0)        # (B, F1, N_PATCH)
    return co.reshape(b, OUT_FEATS)


# --------------------------------------------------------------------------- params
def init_params(key):
    ks = jax.random.split(key, 7)

    def lin(kk, fan_in, fan_out):
        kw, kb = jax.random.split(kk)
        bound = 1.0 / math.sqrt(fan_in)
        w = jax.random.uniform(kw, (fan_in, fan_out), jnp.float32, -bound, bound)
        bias = jax.random.uniform(kb, (1, fan_out), jnp.float32, -bound, bound)
        return w, bias

    wq, bq = lin(ks[0], D_MODEL, DIM_K)
    wk, bk = lin(ks[1], D_MODEL, DIM_K)
    wv, bv = lin(ks[2], D_MODEL, DIM_V)
    wo, bo = lin(ks[3], DIM_V, D_MODEL)
    cbound = 1.0 / math.sqrt(KH * KW)
    wconv = jax.random.uniform(ks[4], (F1, KH, KW), jnp.float32, -cbound, cbound)
    # non-trivial LayerNorm affine so that the weight-folding path is exercised
    ln_w = 1.0 + 0.1 * jax.random.uniform(ks[5], (1, D_MODEL), jnp.float32, -1.0, 1.0)
    ln_b = 0.1 * jax.random.uniform(ks[6], (1, D_MODEL), jnp.float32, -1.0, 1.0)
    return dict(wq=wq, bq=bq, wk=wk, bk=bk, wv=wv, bv=bv, wo=wo, bo=bo,
                ln_w=ln_w, ln_b=ln_b, wconv=wconv)


if __name__ == "__main__":
    key = jax.random.PRNGKey(0)
    k_x, k_p = jax.random.split(key)
    x = jax.random.normal(k_x, (BATCH, SEQ, D_MODEL), jnp.float32)
    params = init_params(k_p)

    kparams = prepare_params(params)        # one-time weight folding, not per-call

    out = encoder_last_forward(x, kparams)
    out = jax.block_until_ready(out)

    assert out.shape == (BATCH, OUT_FEATS), out.shape
    assert bool(jnp.all(jnp.isfinite(out)))

    ref = reference_forward(x, params)
    assert bool(jnp.allclose(out, ref, rtol=1e-2, atol=1e-2)), \
        float(jnp.max(jnp.abs(out - ref)))

    print("KERNEL_OK")
</pallas_src>

<mosaic_0001>
module attributes {stable_mosaic.version = 11 : i64} {
  func.func @encoder_last_kernel(%arg0: memref<32x32xf32, #tpu.memory_space<vmem>>, %arg1: memref<2x32x24xf32, #tpu.memory_space<vmem>>, %arg2: memref<2x1x24xf32, #tpu.memory_space<vmem>>, %arg3: memref<2x8x32xf32, #tpu.memory_space<vmem>>, %arg4: memref<1x32xf32, #tpu.memory_space<vmem>>, %arg5: memref<64x64xf32, #tpu.memory_space<vmem>>, %arg6: memref<64x64xf32, #tpu.memory_space<vmem>>, %arg7: memref<32x512xf32, #tpu.memory_space<vmem>>, %arg8: memref<512x32xf32, #tpu.memory_space<vmem>>, %arg9: memref<2x32xf32, #tpu.memory_space<vmem>>, %arg10: memref<32x512xf32, #tpu.memory_space<vmem>>, %arg11: memref<1x32xf32, #tpu.memory_space<vmem>>, %arg12: memref<2x32xf32, #tpu.memory_space<vmem>>) attributes {dimension_semantics = [], scalar_prefetch = 0 : i64, scratch_operands = 0 : i64, tpu.core_type = #tpu.core_type<tc>} {
    %c0 = arith.constant 0 : index
    %c0_0 = arith.constant 0 : index
    %0 = vector.load %arg0[%c0, %c0_0] : memref<32x32xf32, #tpu.memory_space<vmem>>, vector<32x32xf32>
    %c0_1 = arith.constant 0 : index
    %c0_2 = arith.constant 0 : index
    %c0_3 = arith.constant 0 : index
    %1 = vector.load %arg1[%c0_1, %c0_2, %c0_3] : memref<2x32x24xf32, #tpu.memory_space<vmem>>, vector<1x32x24xf32>
    %2 = vector.shape_cast %1 : vector<1x32x24xf32> to vector<32x24xf32>
    %cst = arith.constant dense<0.000000e+00> : vector<32x24xf32>
    %3 = tpu.matmul %0, %2, %cst {dimension_numbers = #tpu.dot_dimension_numbers<[1], [0], [0], [1], [0, 0, 1, 1], [], []>} : vector<32x32xf32>, vector<32x24xf32>, vector<32x24xf32> -> vector<32x24xf32>
    %c0_4 = arith.constant 0 : index
    %c0_5 = arith.constant 0 : index
    %c0_6 = arith.constant 0 : index
    %4 = vector.load %arg2[%c0_4, %c0_5, %c0_6] : memref<2x1x24xf32, #tpu.memory_space<vmem>>, vector<1x1x24xf32>
    %5 = vector.shape_cast %4 : vector<1x1x24xf32> to vector<1x24xf32>
    %6 = vector.broadcast %5 : vector<1x24xf32> to vector<32x24xf32>
    %7 = arith.addf %3, %6 : vector<32x24xf32>
    %c1 = arith.constant 1 : index
    %c0_7 = arith.constant 0 : index
    %c0_8 = arith.constant 0 : index
    %8 = vector.load %arg1[%c1, %c0_7, %c0_8] : memref<2x32x24xf32, #tpu.memory_space<vmem>>, vector<1x32x24xf32>
    %9 = vector.shape_cast %8 : vector<1x32x24xf32> to vector<32x24xf32>
    %cst_9 = arith.constant dense<0.000000e+00> : vector<32x24xf32>
    %10 = tpu.matmul %0, %9, %cst_9 {dimension_numbers = #tpu.dot_dimension_numbers<[1], [0], [0], [1], [0, 0, 1, 1], [], []>} : vector<32x32xf32>, vector<32x24xf32>, vector<32x24xf32> -> vector<32x24xf32>
    %c1_10 = arith.constant 1 : index
    %c0_11 = arith.constant 0 : index
    %c0_12 = arith.constant 0 : index
    %11 = vector.load %arg2[%c1_10, %c0_11, %c0_12] : memref<2x1x24xf32, #tpu.memory_space<vmem>>, vector<1x1x24xf32>
    %12 = vector.shape_cast %11 : vector<1x1x24xf32> to vector<1x24xf32>
    %13 = vector.broadcast %12 : vector<1x24xf32> to vector<32x24xf32>
    %14 = arith.addf %10, %13 : vector<32x24xf32>
    %15 = tpu.concatenate %7, %14 in 0 : vector<32x24xf32>, vector<32x24xf32> -> vector<64x24xf32>
    %16 = vector.extract_strided_slice %15 {offsets = [0, 0], sizes = [64, 8], strides = [1, 1]} : vector<64x24xf32> to vector<64x8xf32>
    %17 = vector.extract_strided_slice %15 {offsets = [0, 8], sizes = [64, 8], strides = [1, 1]} : vector<64x24xf32> to vector<64x8xf32>
    %18 = vector.extract_strided_slice %15 {offsets = [0, 16], sizes = [64, 8], strides = [1, 1]} : vector<64x24xf32> to vector<64x8xf32>
    %cst_13 = arith.constant dense<0.000000e+00> : vector<64x64xf32>
    %19 = tpu.matmul %16, %17, %cst_13 {dimension_numbers = #tpu.dot_dimension_numbers<[1], [1], [0], [0], [0, 0, 1, 0], [], []>} : vector<64x8xf32>, vector<64x8xf32>, vector<64x64xf32> -> vector<64x64xf32>
    %c0_14 = arith.constant 0 : index
    %c0_15 = arith.constant 0 : index
    %20 = vector.load %arg5[%c0_14, %c0_15] : memref<64x64xf32, #tpu.memory_space<vmem>>, vector<64x64xf32>
    %21 = arith.mulf %19, %20 : vector<64x64xf32>
    %cst_16 = arith.constant dense<0.000000e+00> : vector<64xf32>
    %22 = vector.multi_reduction <add>, %21, %cst_16 [1] : vector<64x64xf32> to vector<64xf32>
    %23 = vector.shape_cast %22 : vector<64xf32> to vector<64x1xf32>
    %cst_17 = arith.constant 6.250000e-02 : f32
    %24 = vector.broadcast %cst_17 : f32 to vector<64x1xf32>
    %25 = arith.mulf %23, %24 : vector<64x1xf32>
    %c0_18 = arith.constant 0 : index
    %c0_19 = arith.constant 0 : index
    %26 = vector.load %arg6[%c0_18, %c0_19] : memref<64x64xf32, #tpu.memory_space<vmem>>, vector<64x64xf32>
    %27 = arith.addf %21, %26 : vector<64x64xf32>
    %28 = vector.broadcast %25 : vector<64x1xf32> to vector<64x64xf32>
    %29 = arith.cmpf ogt, %27, %28 : vector<64x64xf32>
    %cst_20 = arith.constant -1.000000e+30 : f32
    %30 = vector.broadcast %cst_20 : f32 to vector<64x64xf32>
    %31 = arith.select %29, %27, %30 : vector<64x64xi1>, vector<64x64xf32>
    %cst_21 = arith.constant dense<0xFF800000> : vector<64xf32>
    %32 = vector.multi_reduction <maximumf>, %31, %cst_21 [1] : vector<64x64xf32> to vector<64xf32>
    %33 = vector.shape_cast %32 : vector<64xf32> to vector<64x1xf32>
    %34 = vector.broadcast %33 : vector<64x1xf32> to vector<64x64xf32>
    %35 = arith.subf %31, %34 : vector<64x64xf32>
    %36 = math.exp %35 : vector<64x64xf32>
    %cst_22 = arith.constant dense<0.000000e+00> : vector<64xf32>
    %37 = vector.multi_reduction <add>, %36, %cst_22 [1] : vector<64x64xf32> to vector<64xf32>
    %38 = vector.shape_cast %37 : vector<64xf32> to vector<64x1xf32>
    %39 = tpu.reciprocal %38 {approx = true} : vector<64x1xf32> -> vector<64x1xf32>
    %40 = vector.broadcast %39 : vector<64x1xf32> to vector<64x64xf32>
    %41 = arith.mulf %36, %40 : vector<64x64xf32>
    %cst_23 = arith.constant dense<0.000000e+00> : vector<64x8xf32>
    %42 = tpu.matmul %41, %18, %cst_23 {dimension_numbers = #tpu.dot_dimension_numbers<[1], [0], [0], [1], [0, 0, 1, 1], [], []>} : vector<64x64xf32>, vector<64x8xf32>, vector<64x8xf32> -> vector<64x8xf32>
    %43 = vector.extract_strided_slice %42 {offsets = [0, 0], sizes = [32, 8], strides = [1, 1]} : vector<64x8xf32> to vector<32x8xf32>
    %c0_24 = arith.constant 0 : index
    %c0_25 = arith.constant 0 : index
    %c0_26 = arith.constant 0 : index
    %44 = vector.load %arg3[%c0_24, %c0_25, %c0_26] : memref<2x8x32xf32, #tpu.memory_space<vmem>>, vector<1x8x32xf32>
    %45 = vector.shape_cast %44 : vector<1x8x32xf32> to vector<8x32xf32>
    %cst_27 = arith.constant dense<0.000000e+00> : vector<32x32xf32>
    %46 = tpu.matmul %43, %45, %cst_27 {dimension_numbers = #tpu.dot_dimension_numbers<[1], [0], [0], [1], [0, 0, 1, 1], [], []>} : vector<32x8xf32>, vector<8x32xf32>, vector<32x32xf32> -> vector<32x32xf32>
    %47 = vector.extract_strided_slice %42 {offsets = [32, 0], sizes = [32, 8], strides = [1, 1]} : vector<64x8xf32> to vector<32x8xf32>
    %c1_28 = arith.constant 1 : index
    %c0_29 = arith.constant 0 : index
    %c0_30 = arith.constant 0 : index
    %48 = vector.load %arg3[%c1_28, %c0_29, %c0_30] : memref<2x8x32xf32, #tpu.memory_space<vmem>>, vector<1x8x32xf32>
    %49 = vector.shape_cast %48 : vector<1x8x32xf32> to vector<8x32xf32>
    %cst_31 = arith.constant dense<0.000000e+00> : vector<32x32xf32>
    %50 = tpu.matmul %47, %49, %cst_31 {dimension_numbers = #tpu.dot_dimension_numbers<[1], [0], [0], [1], [0, 0, 1, 1], [], []>} : vector<32x8xf32>, vector<8x32xf32>, vector<32x32xf32> -> vector<32x32xf32>
    %51 = arith.addf %46, %50 : vector<32x32xf32>
    %c0_32 = arith.constant 0 : index
    %c0_33 = arith.constant 0 : index
    %52 = vector.load %arg4[%c0_32, %c0_33] : memref<1x32xf32, #tpu.memory_space<vmem>>, vector<1x32xf32>
    %53 = vector.broadcast %52 : vector<1x32xf32> to vector<32x32xf32>
    %54 = arith.addf %51, %53 : vector<32x32xf32>
    %55 = arith.addf %0, %54 : vector<32x32xf32>
    %cst_34 = arith.constant dense<0.000000e+00> : vector<32xf32>
    %56 = vector.multi_reduction <add>, %55, %cst_34 [1] : vector<32x32xf32> to vector<32xf32>
    %57 = vector.shape_cast %56 : vector<32xf32> to vector<32x1xf32>
    %cst_35 = arith.constant 3.200000e+01 : f32
    %58 = vector.broadcast %cst_35 : f32 to vector<32x1xf32>
    %59 = arith.divf %57, %58 : vector<32x1xf32>
    %60 = vector.broadcast %59 : vector<32x1xf32> to vector<32x32xf32>
    %61 = arith.subf %55, %60 : vector<32x32xf32>
    %62 = arith.mulf %61, %61 : vector<32x32xf32>
    %cst_36 = arith.constant dense<0.000000e+00> : vector<32xf32>
    %63 = vector.multi_reduction <add>, %62, %cst_36 [1] : vector<32x32xf32> to vector<32xf32>
    %64 = vector.shape_cast %63 : vector<32xf32> to vector<32x1xf32>
    %cst_37 = arith.constant 3.200000e+01 : f32
    %65 = vector.broadcast %cst_37 : f32 to vector<32x1xf32>
    %66 = arith.divf %64, %65 : vector<32x1xf32>
    %67 = vector.broadcast %59 : vector<32x1xf32> to vector<32x32xf32>
    %68 = arith.subf %55, %67 : vector<32x32xf32>
    %cst_38 = arith.constant 9.99999974E-6 : f32
    %69 = vector.broadcast %cst_38 : f32 to vector<32x1xf32>
    %70 = arith.addf %66, %69 : vector<32x1xf32>
    %71 = math.rsqrt %70 : vector<32x1xf32>
    %72 = vector.broadcast %71 : vector<32x1xf32> to vector<32x32xf32>
    %73 = arith.mulf %68, %72 : vector<32x32xf32>
    %c0_39 = arith.constant 0 : index
    %c0_40 = arith.constant 0 : index
    %74 = vector.load %arg7[%c0_39, %c0_40] : memref<32x512xf32, #tpu.memory_space<vmem>>, vector<32x512xf32>
    %cst_41 = arith.constant dense<0.000000e+00> : vector<32x512xf32>
    %75 = tpu.matmul %73, %74, %cst_41 {dimension_numbers = #tpu.dot_dimension_numbers<[1], [0], [0], [1], [0, 0, 1, 1], [], []>} : vector<32x32xf32>, vector<32x512xf32>, vector<32x512xf32> -> vector<32x512xf32>
    %c0_42 = arith.constant 0 : index
    %c0_43 = arith.constant 0 : index
    %76 = vector.load %arg10[%c0_42, %c0_43] : memref<32x512xf32, #tpu.memory_space<vmem>>, vector<32x512xf32>
    %77 = arith.mulf %75, %76 : vector<32x512xf32>
    %c0_44 = arith.constant 0 : index
    %c0_45 = arith.constant 0 : index
    %78 = vector.load %arg8[%c0_44, %c0_45] : memref<512x32xf32, #tpu.memory_space<vmem>>, vector<512x32xf32>
    %cst_46 = arith.constant dense<0.000000e+00> : vector<32x32xf32>
    %79 = tpu.matmul %77, %78, %cst_46 {dimension_numbers = #tpu.dot_dimension_numbers<[1], [0], [0], [1], [0, 0, 1, 1], [], []>} : vector<32x512xf32>, vector<512x32xf32>, vector<32x32xf32> -> vector<32x32xf32>
    %c0_47 = arith.constant 0 : index
    %c0_48 = arith.constant 0 : index
    %80 = vector.load %arg9[%c0_47, %c0_48] : memref<2x32xf32, #tpu.memory_space<vmem>>, vector<2x32xf32>
    %cst_49 = arith.constant dense<0.000000e+00> : vector<2x32xf32>
    %81 = tpu.matmul %80, %79, %cst_49 {dimension_numbers = #tpu.dot_dimension_numbers<[1], [0], [0], [1], [0, 0, 1, 1], [], []>} : vector<2x32xf32>, vector<32x32xf32>, vector<2x32xf32> -> vector<2x32xf32>
    %c0_50 = arith.constant 0 : index
    %c0_51 = arith.constant 0 : index
    %82 = vector.load %arg11[%c0_50, %c0_51] : memref<1x32xf32, #tpu.memory_space<vmem>>, vector<1x32xf32>
    %83 = vector.broadcast %82 : vector<1x32xf32> to vector<2x32xf32>
    %84 = arith.addf %81, %83 : vector<2x32xf32>
    %cst_52 = arith.constant 0.000000e+00 : f32
    %85 = vector.broadcast %cst_52 : f32 to vector<2x32xf32>
    %86 = arith.maximumf %84, %85 : vector<2x32xf32>
    %c0_53 = arith.constant 0 : index
    %c0_54 = arith.constant 0 : index
    %87 = vector.load %arg12[%c0_53, %c0_54] : memref<2x32xf32, #tpu.memory_space<vmem>>, vector<2x32xf32>
    tpu.vector_store %arg12[%c0_53, %c0_54], %86 {strides = array<i32>} : memref<2x32xf32, #tpu.memory_space<vmem>>, vector<2x32xf32>,
    return
  }
}

</mosaic_0001>

<llo_original>
// kernel: encoder_last_forward.1
$region0: #{encoder_last_forward.1}
  #allocation0 [shape = 'u32[]', space=smem, size = 0x4, offset = 0x4, fixed_abs, tag = 'smem constant byte address 0x4 - core index']
  #allocation1 [shape = 'u32[144,128]{1,0:T(1,128)}', space=vmem, size = 0x12000, scoped, tag = 'internal scratch']
  %s0 = inlined_call_operand.vmem [shape: f32[32,32], index: 0, kind: input, shape index: {}]
  %s1 = inlined_call_operand.vmem [shape: f32[2,32,24], index: 1, kind: input, shape index: {}]
  %s2 = inlined_call_operand.vmem [shape: f32[2,1,24], index: 2, kind: input, shape index: {}]
  %s3 = inlined_call_operand.vmem [shape: f32[2,8,32], index: 3, kind: input, shape index: {}]
  %s4 = inlined_call_operand.vmem [shape: f32[1,32], index: 4, kind: input, shape index: {}]
  %s5 = inlined_call_operand.vmem [shape: f32[64,64], index: 5, kind: input, shape index: {}]
  %s6 = inlined_call_operand.vmem [shape: f32[64,64], index: 6, kind: input, shape index: {}]
  %s7 = inlined_call_operand.vmem [shape: f32[32,512], index: 7, kind: input, shape index: {}]
  %s8 = inlined_call_operand.vmem [shape: f32[512,32], index: 8, kind: input, shape index: {}]
  %s9 = inlined_call_operand.vmem [shape: f32[2,32], index: 9, kind: input, shape index: {}]
  %s10 = inlined_call_operand.vmem [shape: f32[32,512], index: 10, kind: input, shape index: {}]
  %s11 = inlined_call_operand.vmem [shape: f32[1,32], index: 11, kind: input, shape index: {}]
  %s12 = inlined_call_operand.hbm [shape: f32[2,32], index: 12, kind: output, shape index: {}]
  %s13 = sld [smem:[#allocation0]]
  $region58: #{encoder_last_forward.1} parent=0
    _
  %s15 = ssub.s32 1, %s13
  %s16 = scalar_select 0, %s15, %s13
  $region1: #{encoder_last_forward.1} parent=0
    #allocation2 [shape = 'u8[1024]{0}', space=vmem, size = 0x400, scoped, tag = 'output window, operand 0, single buffered']
    #allocation3 [shape = 's32[1]{0}', space=sflag, size = 0x4, scoped, tag = 'scoped memory for encoder_last_forward.1']
    %17 = vsyncpa [#allocation3], 0
    // Predicated region
    $region2: #{encoder_last_forward.1} parent=1 // pred_check
      _
    $region3: #{encoder_last_forward.1} parent=1 // pred_check_branch
      %19 = sbr.rel (0) target = $region5
    $region4: #{encoder_last_forward.1} parent=1 // pred_region
      _
    $region5: #{encoder_last_forward.1} parent=1 // pred_fallthru
      _
    // Predicated region
    $region6: #{encoder_last_forward.1} parent=1 // pred_check
      _
    $region7: #{encoder_last_forward.1} parent=1 // pred_check_branch
      %21 = sbr.rel (0) target = $region9
    $region8: #{encoder_last_forward.1} parent=1 // pred_region
      _
    $region9: #{encoder_last_forward.1} parent=1 // pred_fallthru
      _
    // Predicated region
    $region10: #{encoder_last_forward.1} parent=1 // pred_check
      _
    $region11: #{encoder_last_forward.1} parent=1 // pred_check_branch
      %23 = sbr.rel (0) target = $region13
    $region12: #{encoder_last_forward.1} parent=1 // pred_region
      _
    $region13: #{encoder_last_forward.1} parent=1 // pred_fallthru
      _
    // Predicated region
    $region14: #{encoder_last_forward.1} parent=1 // pred_check
      _
    $region15: #{encoder_last_forward.1} parent=1 // pred_check_branch
      %25 = sbr.rel (0) target = $region17
    $region16: #{encoder_last_forward.1} parent=1 // pred_region
      _
    $region17: #{encoder_last_forward.1} parent=1 // pred_fallthru
      _
    // Predicated region
    $region18: #{encoder_last_forward.1} parent=1 // pred_check
      _
    $region19: #{encoder_last_forward.1} parent=1 // pred_check_branch
      %27 = sbr.rel (0) target = $region21
    $region20: #{encoder_last_forward.1} parent=1 // pred_region
      _
    $region21: #{encoder_last_forward.1} parent=1 // pred_fallthru
      _
    // Predicated region
    $region22: #{encoder_last_forward.1} parent=1 // pred_check
      _
    $region23: #{encoder_last_forward.1} parent=1 // pred_check_branch
      %29 = sbr.rel (0) target = $region25
    $region24: #{encoder_last_forward.1} parent=1 // pred_region
      _
    $region25: #{encoder_last_forward.1} parent=1 // pred_fallthru
      _
    // Predicated region
    $region26: #{encoder_last_forward.1} parent=1 // pred_check
      _
    $region27: #{encoder_last_forward.1} parent=1 // pred_check_branch
      %31 = sbr.rel (0) target = $region29
    $region28: #{encoder_last_forward.1} parent=1 // pred_region
      _
    $region29: #{encoder_last_forward.1} parent=1 // pred_fallthru
      _
    // Predicated region
    $region30: #{encoder_last_forward.1} parent=1 // pred_check
      _
    $region31: #{encoder_last_forward.1} parent=1 // pred_check_branch
      %33 = sbr.rel (0) target = $region33
    $region32: #{encoder_last_forward.1} parent=1 // pred_region
      _
    $region33: #{encoder_last_forward.1} parent=1 // pred_fallthru
      _
    // Predicated region
    $region34: #{encoder_last_forward.1} parent=1 // pred_check
      _
    $region35: #{encoder_last_forward.1} parent=1 // pred_check_branch
      %35 = sbr.rel (0) target = $region37
    $region36: #{encoder_last_forward.1} parent=1 // pred_region
      _
    $region37: #{encoder_last_forward.1} parent=1 // pred_fallthru
      _
    // Predicated region
    $region38: #{encoder_last_forward.1} parent=1 // pred_check
      _
    $region39: #{encoder_last_forward.1} parent=1 // pred_check_branch
      %37 = sbr.rel (0) target = $region41
    $region40: #{encoder_last_forward.1} parent=1 // pred_region
      _
    $region41: #{encoder_last_forward.1} parent=1 // pred_fallthru
      _
    // Predicated region
    $region42: #{encoder_last_forward.1} parent=1 // pred_check
      _
    $region43: #{encoder_last_forward.1} parent=1 // pred_check_branch
      %39 = sbr.rel (0) target = $region45
    $region44: #{encoder_last_forward.1} parent=1 // pred_region
      _
    $region45: #{encoder_last_forward.1} parent=1 // pred_fallthru
      _
    // Predicated region
    $region46: #{encoder_last_forward.1} parent=1 // pred_check
      _
    $region47: #{encoder_last_forward.1} parent=1 // pred_check_branch
      %41 = sbr.rel (0) target = $region49
    $region48: #{encoder_last_forward.1} parent=1 // pred_region
      _
    $region49: #{encoder_last_forward.1} parent=1 // pred_fallthru
      _
    %v42 = vld [vmem:[%s0] sm:$0xff]
    %v43 = vld [vmem:[%s0 + $0x8] sm:$0xff]
    %v44 = vld [vmem:[%s0 + $0x10] sm:$0xff]
    %v45 = vld [vmem:[%s0 + $0x18] sm:$0xff]
    %v46 = vld [vmem:[%s1] sm:$0xff]
    %v47 = vld [vmem:[%s1 + $0x8] sm:$0xff]
    %v48 = vld [vmem:[%s1 + $0x10] sm:$0xff]
    %v49 = vld [vmem:[%s1 + $0x18] sm:$0xff]
    %v50 = vld [vmem:[%s2] sm:$0x1]
    %v52 = vlaneseq
    %v53 = vshrl.u32 %v52, 7
    %v54 = vsub.s32 0, %v53
    %v55 = vrot.slane %v50, %v54
    %vm57 = vcmask 261120
    %v59 = vsel %vm57, %v42, 0
    %v62 = vsel %vm57, %v43, 0
    %v65 = vsel %vm57, %v44, 0
    %v68 = vsel %vm57, %v45, 0
    %70 = vmatprep.subr.mxu0 0.0
    %71 = vmatpush1.msra.mxu0 %v46
    %72 = vmatprep.subr.mxu0 0.0
    %73 = vmatpush1.msra.mxu0 %v47
    %74 = vmatprep.subr.mxu0 0.0
    %75 = vmatpush1.msra.mxu0 %v48
    %76 = vmatprep.subr.mxu0 0.0
    %77 = vmatpush1.msra.mxu0 %v49
    %78 = vmatprep.subr.mxu0 0.0
    %79 = vmatpush1.msra.mxu0 0.0
    %80 = vmatprep.subr.mxu0 0.0
    %81 = vmatpush1.msra.mxu0 0.0
    %82 = vmatprep.subr.mxu0 0.0
    %83 = vmatpush1.msra.mxu0 0.0
    %84 = vmatprep.subr.mxu0 0.0
    %85 = vmatpush1.msra.mxu0 0.0
    %86 = vmatprep.subr.mxu0 0.0
    %87 = vmatpush1.msra.mxu0 0.0
    %88 = vmatprep.subr.mxu0 0.0
    %89 = vmatpush1.msra.mxu0 0.0
    %90 = vmatprep.subr.mxu0 0.0
    %91 = vmatpush1.msra.mxu0 0.0
    %92 = vmatprep.subr.mxu0 0.0
    %93 = vmatpush1.msra.mxu0 0.0
    %94 = vmatprep.subr.mxu0 0.0
    %95 = vmatpush1.msra.mxu0 0.0
    %96 = vmatprep.subr.mxu0 0.0
    %97 = vmatpush1.msra.mxu0 0.0
    %98 = vmatprep.subr.mxu0 0.0
    %99 = vmatpush1.msra.mxu0 0.0
    %100 = vmatprep.subr.mxu0 0.0
    %101 = vmatpush1.msra.mxu0 0.0
    %102 = vmatprep.subr.mxu0 0.0
    %103 = vmatpush1.msra.mxu0 0.0
    %104 = vmatprep.subr.mxu0 0.0
    %105 = vmatpush1.msra.mxu0 0.0
    %106 = vmatprep.subr.mxu0 0.0
    %107 = vmatpush1.msra.mxu0 0.0
    %108 = vmatprep.subr.mxu0 0.0
    %109 = vmatpush1.msra.mxu0 0.0
    %110 = vmatprep.subr.mxu0 0.0
    %111 = vmatpush1.msra.mxu0 0.0
    %112 = vmatprep.subr.mxu0 0.0
    %113 = vmatpush1.msra.mxu0 0.0
    %114 = vmatprep.subr.mxu0 0.0
    %115 = vmatpush1.msra.mxu0 0.0
    %116 = vmatprep.subr.mxu0 0.0
    %117 = vmatpush1.msra.mxu0 0.0
    %118 = vmatprep.subr.mxu0 0.0
    %119 = vmatpush1.msra.mxu0 0.0
    %120 = vmatprep.subr.mxu0 0.0
    %121 = vmatpush1.msra.mxu0 0.0
    %122 = vmatprep.subr.mxu0 0.0
    %123 = vmatpush1.msra.mxu0 0.0
    %124 = vmatprep.subr.mxu0 0.0
    %125 = vmatpush1.msra.mxu0 0.0
    %126 = vmatprep.subr.mxu0 0.0
    %127 = vmatpush1.msra.mxu0 0.0
    %128 = vmatprep.subr.mxu0 0.0
    %129 = vmatpush1.msra.mxu0 0.0
    %130 = vmatprep.subr.mxu0 0.0
    %131 = vmatpush1.msra.mxu0 0.0
    %132 = vmatprep.subr.mxu0 0.0
    %133 = vmatpush1.msra.mxu0 0.0
    %134 = vmatprep.mubr.f32.mxu0 0.0
    %135 = vmatmul.mubr.f32.gmra.mrb[0].mxu0 %v59
    %v136 = vpop.f32.mrb[0].mxu0
    %v137 = vadd.f32 %v55, %v136
    %v138 = vpop.f32.mrb[0].mxu0
    %139 = vmatprep.mubr.f32.mxu0 0.0
    %140 = vmatmul.mubr.f32.gmra.mrb[0].mxu0 %v62
    %v141 = vpop.f32.mrb[0].mxu0
    %v142 = vadd.f32 %v55, %v141
    %v143 = vpop.f32.mrb[0].mxu0
    %144 = vmatprep.mubr.f32.mxu0 0.0
    %145 = vmatmul.mubr.f32.gmra.mrb[0].mxu0 %v65
    %v146 = vpop.f32.mrb[0].mxu0
    %v147 = vadd.f32 %v55, %v146
    %v148 = vpop.f32.mrb[0].mxu0
    %149 = vmatprep.mubr.f32.mxu0 0.0
    %150 = vmatmul.mubr.f32.gmra.mrb[0].mxu0 %v68
    %v151 = vpop.f32.mrb[0].mxu0
    %v152 = vadd.f32 %v55, %v151
    %v153 = vpop.f32.mrb[0].mxu0
    %154 = vdwg.mxu0
    %s155 = scalar_lea.vmem %s1, 32
    %v156 = vld [vmem:[%s155] sm:$0xff]
    %v157 = vld [vmem:[%s155 + $0x8] sm:$0xff]
    %v158 = vld [vmem:[%s155 + $0x10] sm:$0xff]
    %v159 = vld [vmem:[%s155 + $0x18] sm:$0xff]
    %s160 = scalar_lea.vmem %s2, 1
    %v161 = vld [vmem:[%s160] sm:$0x1]
    %v163 = vlaneseq
    %v164 = vshrl.u32 %v163, 7
    %v165 = vsub.s32 0, %v164
    %v166 = vrot.slane %v161, %v165
    %168 = vmatprep.subr.mxu0 0.0
    %169 = vmatpush1.msra.mxu0 %v156
    %170 = vmatprep.subr.mxu0 0.0
    %171 = vmatpush1.msra.mxu0 %v157
    %172 = vmatprep.subr.mxu0 0.0
    %173 = vmatpush1.msra.mxu0 %v158
    %174 = vmatprep.subr.mxu0 0.0
    %175 = vmatpush1.msra.mxu0 %v159
    %176 = vmatprep.subr.mxu0 0.0
    %177 = vmatpush1.msra.mxu0 0.0
    %178 = vmatprep.subr.mxu0 0.0
    %179 = vmatpush1.msra.mxu0 0.0
    %180 = vmatprep.subr.mxu0 0.0
    %181 = vmatpush1.msra.mxu0 0.0
    %182 = vmatprep.subr.mxu0 0.0
    %183 = vmatpush1.msra.mxu0 0.0
    %184 = vmatprep.subr.mxu0 0.0
    %185 = vmatpush1.msra.mxu0 0.0
    %186 = vmatprep.subr.mxu0 0.0
    %187 = vmatpush1.msra.mxu0 0.0
    %188 = vmatprep.subr.mxu0 0.0
    %189 = vmatpush1.msra.mxu0 0.0
    %190 = vmatprep.subr.mxu0 0.0
    %191 = vmatpush1.msra.mxu0 0.0
    %192 = vmatprep.subr.mxu0 0.0
    %193 = vmatpush1.msra.mxu0 0.0
    %194 = vmatprep.subr.mxu0 0.0
    %195 = vmatpush1.msra.mxu0 0.0
    %196 = vmatprep.subr.mxu0 0.0
    %197 = vmatpush1.msra.mxu0 0.0
    %198 = vmatprep.subr.mxu0 0.0
    %199 = vmatpush1.msra.mxu0 0.0
    %200 = vmatprep.subr.mxu0 0.0
    %201 = vmatpush1.msra.mxu0 0.0
    %202 = vmatprep.subr.mxu0 0.0
    %203 = vmatpush1.msra.mxu0 0.0
    %204 = vmatprep.subr.mxu0 0.0
    %205 = vmatpush1.msra.mxu0 0.0
    %206 = vmatprep.subr.mxu0 0.0
    %207 = vmatpush1.msra.mxu0 0.0
    %208 = vmatprep.subr.mxu0 0.0
    %209 = vmatpush1.msra.mxu0 0.0
    %210 = vmatprep.subr.mxu0 0.0
    %211 = vmatpush1.msra.mxu0 0.0
    %212 = vmatprep.subr.mxu0 0.0
    %213 = vmatpush1.msra.mxu0 0.0
    %214 = vmatprep.subr.mxu0 0.0
    %215 = vmatpush1.msra.mxu0 0.0
    %216 = vmatprep.subr.mxu0 0.0
    %217 = vmatpush1.msra.mxu0 0.0
    %218 = vmatprep.subr.mxu0 0.0
    %219 = vmatpush1.msra.mxu0 0.0
    %220 = vmatprep.subr.mxu0 0.0
    %221 = vmatpush1.msra.mxu0 0.0
    %222 = vmatprep.subr.mxu0 0.0
    %223 = vmatpush1.msra.mxu0 0.0
    %224 = vmatprep.subr.mxu0 0.0
    %225 = vmatpush1.msra.mxu0 0.0
    %226 = vmatprep.subr.mxu0 0.0
    %227 = vmatpush1.msra.mxu0 0.0
    %228 = vmatprep.subr.mxu0 0.0
    %229 = vmatpush1.msra.mxu0 0.0
    %230 = vmatprep.subr.mxu0 0.0
    %231 = vmatpush1.msra.mxu0 0.0
    %232 = vmatprep.mubr.f32.mxu0 0.0
    %233 = vmatmul.mubr.f32.gmra.mrb[0].mxu0 %v59
    %v234 = vpop.f32.mrb[0].mxu0
    %v235 = vadd.f32 %v166, %v234
    %v236 = vpop.f32.mrb[0].mxu0
    %237 = vmatprep.mubr.f32.mxu0 0.0
    %238 = vmatmul.mubr.f32.gmra.mrb[0].mxu0 %v62
    %v239 = vpop.f32.mrb[0].mxu0
    %v240 = vadd.f32 %v166, %v239
    %v241 = vpop.f32.mrb[0].mxu0
    %242 = vmatprep.mubr.f32.mxu0 0.0
    %243 = vmatmul.mubr.f32.gmra.mrb[0].mxu0 %v65
    %v244 = vpop.f32.mrb[0].mxu0
    %v245 = vadd.f32 %v166, %v244
    %v246 = vpop.f32.mrb[0].mxu0
    %247 = vmatprep.mubr.f32.mxu0 0.0
    %248 = vmatmul.mubr.f32.gmra.mrb[0].mxu0 %v68
    %v249 = vpop.f32.mrb[0].mxu0
    %v250 = vadd.f32 %v166, %v249
    %v251 = vpop.f32.mrb[0].mxu0
    %252 = vdwg.mxu0
    %261 = vrot.lane.b32.xlu0 %v137, 120
    %v262 = vpop.permute.xlu0 %261
    %263 = vrot.lane.b32.xlu0 %v142, 120
    %v264 = vpop.permute.xlu0 %263
    %265 = vrot.lane.b32.xlu0 %v147, 120
    %v266 = vpop.permute.xlu0 %265
    %267 = vrot.lane.b32.xlu0 %v152, 120
    %v268 = vpop.permute.xlu0 %267
    %269 = vrot.lane.b32.xlu0 %v235, 120
    %v270 = vpop.permute.xlu0 %269
    %271 = vrot.lane.b32.xlu0 %v240, 120
    %v272 = vpop.permute.xlu0 %271
    %273 = vrot.lane.b32.xlu0 %v245, 120
    %v274 = vpop.permute.xlu0 %273
    %275 = vrot.lane.b32.xlu0 %v250, 120
    %v276 = vpop.permute.xlu0 %275
    %vm277 = vcmask 64512
    %v278 = vsel %vm277, %v137, 0
    %v280 = vsel %vm277, %v142, 0
    %v282 = vsel %vm277, %v147, 0
    %v284 = vsel %vm277, %v152, 0
    %v286 = vsel %vm277, %v235, 0
    %v288 = vsel %vm277, %v240, 0
    %v290 = vsel %vm277, %v245, 0
    %v292 = vsel %vm277, %v250, 0
    %v294 = vsel %vm277, %v262, 0
    %v296 = vsel %vm277, %v264, 0
    %v298 = vsel %vm277, %v266, 0
    %v300 = vsel %vm277, %v268, 0
    %v302 = vsel %vm277, %v270, 0
    %v304 = vsel %vm277, %v272, 0
    %v306 = vsel %vm277, %v274, 0
    %v308 = vsel %vm277, %v276, 0
    %310 = vmatprep.subr.mxu0 0.0
    %311 = vmatpush1.xpose.msra.mxu0 %v294
    %312 = vmatprep.subr.mxu0 0.0
    %313 = vmatpush1.xpose.msra.mxu0 %v296
    %314 = vmatprep.subr.mxu0 0.0
    %315 = vmatpush1.xpose.msra.mxu0 %v298
    %316 = vmatprep.subr.mxu0 0.0
    %317 = vmatpush1.xpose.msra.mxu0 %v300
    %318 = vmatprep.subr.mxu0 0.0
    %319 = vmatpush1.xpose.msra.mxu0 %v302
    %320 = vmatprep.subr.mxu0 0.0
    %321 = vmatpush1.xpose.msra.mxu0 %v304
    %322 = vmatprep.subr.mxu0 0.0
    %323 = vmatpush1.xpose.msra.mxu0 %v306
    %324 = vmatprep.subr.mxu0 0.0
    %325 = vmatpush1.xpose.msra.mxu0 %v308
    %326 = vmatprep.subr.mxu0 0.0
    %327 = vmatpush1.xpose.msra.mxu0 0.0
    %328 = vmatprep.subr.mxu0 0.0
    %329 = vmatpush1.xpose.msra.mxu0 0.0
    %330 = vmatprep.subr.mxu0 0.0
    %331 = vmatpush1.xpose.msra.mxu0 0.0
    %332 = vmatprep.subr.mxu0 0.0
    %333 = vmatpush1.xpose.msra.mxu0 0.0
    %334 = vmatprep.subr.mxu0 0.0
    %335 = vmatpush1.xpose.msra.mxu0 0.0
    %336 = vmatprep.subr.mxu0 0.0
    %337 = vmatpush1.xpose.msra.mxu0 0.0
    %338 = vmatprep.subr.mxu0 0.0
    %339 = vmatpush1.xpose.msra.mxu0 0.0
    %340 = vmatprep.subr.mxu0 0.0
    %341 = vmatpush1.xpose.msra.mxu0 0.0
    %342 = vmatprep.subr.mxu0 0.0
    %343 = vmatpush1.xpose.msra.mxu0 0.0
    %344 = vmatprep.subr.mxu0 0.0
    %345 = vmatpush1.xpose.msra.mxu0 0.0
    %346 = vmatprep.subr.mxu0 0.0
    %347 = vmatpush1.xpose.msra.mxu0 0.0
    %348 = vmatprep.subr.mxu0 0.0
    %349 = vmatpush1.xpose.msra.mxu0 0.0
    %350 = vmatprep.subr.mxu0 0.0
    %351 = vmatpush1.xpose.msra.mxu0 0.0
    %352 = vmatprep.subr.mxu0 0.0
    %353 = vmatpush1.xpose.msra.mxu0 0.0
    %354 = vmatprep.subr.mxu0 0.0
    %355 = vmatpush1.xpose.msra.mxu0 0.0
    %356 = vmatprep.subr.mxu0 0.0
    %357 = vmatpush1.xpose.msra.mxu0 0.0
    %358 = vmatprep.subr.mxu0 0.0
    %359 = vmatpush1.xpose.msra.mxu0 0.0
    %360 = vmatprep.subr.mxu0 0.0
    %361 = vmatpush1.xpose.msra.mxu0 0.0
    %362 = vmatprep.subr.mxu0 0.0
    %363 = vmatpush1.xpose.msra.mxu0 0.0
    %364 = vmatprep.subr.mxu0 0.0
    %365 = vmatpush1.xpose.msra.mxu0 0.0
    %366 = vmatprep.subr.mxu0 0.0
    %367 = vmatpush1.xpose.msra.mxu0 0.0
    %368 = vmatprep.subr.mxu0 0.0
    %369 = vmatpush1.xpose.msra.mxu0 0.0
    %370 = vmatprep.subr.mxu0 0.0
    %371 = vmatpush1.xpose.msra.mxu0 0.0
    %372 = vmatprep.subr.mxu0 0.0
    %373 = vmatpush1.xpose.msra.mxu0 0.0
    %374 = vmatprep.mubr.f32.mxu0 0.0
    %375 = vmatmul.mubr.f32.gmra.mrb[0].mxu0 %v278
    %v376 = vpop.f32.mrb[0].mxu0
    %v377 = vadd.f32 0.0, %v376
    %v378 = vpop.f32.mrb[0].mxu0
    %379 = vmatprep.mubr.f32.mxu0 0.0
    %380 = vmatmul.mubr.f32.gmra.mrb[0].mxu0 %v280
    %v381 = vpop.f32.mrb[0].mxu0
    %v382 = vadd.f32 0.0, %v381
    %v383 = vpop.f32.mrb[0].mxu0
    %384 = vmatprep.mubr.f32.mxu0 0.0
    %385 = vmatmul.mubr.f32.gmra.mrb[0].mxu0 %v282
    %v386 = vpop.f32.mrb[0].mxu0
    %v387 = vadd.f32 0.0, %v386
    %v388 = vpop.f32.mrb[0].mxu0
    %389 = vmatprep.mubr.f32.mxu0 0.0
    %390 = vmatmul.mubr.f32.gmra.mrb[0].mxu0 %v284
    %v391 = vpop.f32.mrb[0].mxu0
    %v392 = vadd.f32 0.0, %v391
    %v393 = vpop.f32.mrb[0].mxu0
    %394 = vmatprep.mubr.f32.mxu0 0.0
    %395 = vmatmul.mubr.f32.gmra.mrb[0].mxu0 %v286
    %v396 = vpop.f32.mrb[0].mxu0
    %v397 = vadd.f32 0.0, %v396
    %v398 = vpop.f32.mrb[0].mxu0
    %399 = vmatprep.mubr.f32.mxu0 0.0
    %400 = vmatmul.mubr.f32.gmra.mrb[0].mxu0 %v288
    %v401 = vpop.f32.mrb[0].mxu0
    %v402 = vadd.f32 0.0, %v401
    %v403 = vpop.f32.mrb[0].mxu0
    %404 = vmatprep.mubr.f32.mxu0 0.0
    %405 = vmatmul.mubr.f32.gmra.mrb[0].mxu0 %v290
    %v406 = vpop.f32.mrb[0].mxu0
    %v407 = vadd.f32 0.0, %v406
    %v408 = vpop.f32.mrb[0].mxu0
    %409 = vmatprep.mubr.f32.mxu0 0.0
    %410 = vmatmul.mubr.f32.gmra.mrb[0].mxu0 %v292
    %v411 = vpop.f32.mrb[0].mxu0
    %v412 = vadd.f32 0.0, %v411
    %v413 = vpop.f32.mrb[0].mxu0
    %414 = vdwg.mxu0
    %v415 = vld [vmem:[%s5] sm:$0xff]
    %v416 = vld [vmem:[%s5 + $0x8] sm:$0xff]
    %v417 = vld [vmem:[%s5 + $0x10] sm:$0xff]
    %v418 = vld [vmem:[%s5 + $0x18] sm:$0xff]
    %v419 = vld [vmem:[%s5 + $0x20] sm:$0xff]
    %v420 = vld [vmem:[%s5 + $0x28] sm:$0xff]
    %v421 = vld [vmem:[%s5 + $0x30] sm:$0xff]
    %v422 = vld [vmem:[%s5 + $0x38] sm:$0xff]
    %v423 = vmul.f32 %v377, %v415
    %v424 = vmul.f32 %v382, %v416
    %v425 = vmul.f32 %v387, %v417
    %v426 = vmul.f32 %v392, %v418
    %v427 = vmul.f32 %v397, %v419
    %v428 = vmul.f32 %v402, %v420
    %v429 = vmul.f32 %v407, %v421
    %v430 = vmul.f32 %v412, %v422
    %vm431 = vcmask 523264
    %v432 = vsel %vm431, %v423, 0.0
    %433 = vadd.xlane.f32.xlu0 %v432
    %v434 = vpop.xlane.xlu0 %433
    %v435 = vsel %vm431, %v424, 0.0
    %436 = vadd.xlane.f32.xlu0 %v435
    %v437 = vpop.xlane.xlu0 %436
    %v438 = vsel %vm431, %v425, 0.0
    %439 = vadd.xlane.f32.xlu0 %v438
    %v440 = vpop.xlane.xlu0 %439
    %v441 = vsel %vm431, %v426, 0.0
    %442 = vadd.xlane.f32.xlu0 %v441
    %v443 = vpop.xlane.xlu0 %442
    %v444 = vsel %vm431, %v427, 0.0
    %445 = vadd.xlane.f32.xlu0 %v444
    %v446 = vpop.xlane.xlu0 %445
    %v447 = vsel %vm431, %v428, 0.0
    %448 = vadd.xlane.f32.xlu0 %v447
    %v449 = vpop.xlane.xlu0 %448
    %v450 = vsel %vm431, %v429, 0.0
    %451 = vadd.xlane.f32.xlu0 %v450
    %v452 = vpop.xlane.xlu0 %451
    %v453 = vsel %vm431, %v430, 0.0
    %454 = vadd.xlane.f32.xlu0 %v453
    %v455 = vpop.xlane.xlu0 %454
    %v456 = vmul.f32 %v434, 0.0625
    %v457 = vmul.f32 %v437, 0.0625
    %v458 = vmul.f32 %v440, 0.0625
    %v459 = vmul.f32 %v443, 0.0625
    %v460 = vmul.f32 %v446, 0.0625
    %v461 = vmul.f32 %v449, 0.0625
    %v462 = vmul.f32 %v452, 0.0625
    %v463 = vmul.f32 %v455, 0.0625
    %v464 = vld [vmem:[%s6] sm:$0xff]
    %v465 = vld [vmem:[%s6 + $0x8] sm:$0xff]
    %v466 = vld [vmem:[%s6 + $0x10] sm:$0xff]
    %v467 = vld [vmem:[%s6 + $0x18] sm:$0xff]
    %v468 = vld [vmem:[%s6 + $0x20] sm:$0xff]
    %v469 = vld [vmem:[%s6 + $0x28] sm:$0xff]
    %v470 = vld [vmem:[%s6 + $0x30] sm:$0xff]
    %v471 = vld [vmem:[%s6 + $0x38] sm:$0xff]
    %v472 = vadd.f32 %v423, %v464
    %v473 = vadd.f32 %v424, %v465
    %v474 = vadd.f32 %v425, %v466
    %v475 = vadd.f32 %v426, %v467
    %v476 = vadd.f32 %v427, %v468
    %v477 = vadd.f32 %v428, %v469
    %v478 = vadd.f32 %v429, %v470
    %v479 = vadd.f32 %v430, %v471
    %vm480 = vcmp.gt.f32.partialorder %v472, %v456
    %vm481 = vcmp.gt.f32.partialorder %v473, %v457
    %vm482 = vcmp.gt.f32.partialorder %v474, %v458
    %vm483 = vcmp.gt.f32.partialorder %v475, %v459
    %vm484 = vcmp.gt.f32.partialorder %v476, %v460
    %vm485 = vcmp.gt.f32.partialorder %v477, %v461
    %vm486 = vcmp.gt.f32.partialorder %v478, %v462
    %vm487 = vcmp.gt.f32.partialorder %v479, %v463
    %v488 = vsel %vm480, %v472, -1e+30
    %v489 = vsel %vm481, %v473, -1e+30
    %v490 = vsel %vm482, %v474, -1e+30
    %v491 = vsel %vm483, %v475, -1e+30
    %v492 = vsel %vm484, %v476, -1e+30
    %v493 = vsel %vm485, %v477, -1e+30
    %v494 = vsel %vm486, %v478, -1e+30
    %v495 = vsel %vm487, %v479, -1e+30
    %v496 = vsel %vm431, %v488, -inf
    %497 = vmax.xlane.f32.xlu0 %v496
    %v498 = vpop.xlane.xlu0 %497
    %v499 = vsel %vm431, %v489, -inf
    %500 = vmax.xlane.f32.xlu0 %v499
    %v501 = vpop.xlane.xlu0 %500
    %v502 = vsel %vm431, %v490, -inf
    %503 = vmax.xlane.f32.xlu0 %v502
    %v504 = vpop.xlane.xlu0 %503
    %v505 = vsel %vm431, %v491, -inf
    %506 = vmax.xlane.f32.xlu0 %v505
    %v507 = vpop.xlane.xlu0 %506
    %v508 = vsel %vm431, %v492, -inf
    %509 = vmax.xlane.f32.xlu0 %v508
    %v510 = vpop.xlane.xlu0 %509
    %v511 = vsel %vm431, %v493, -inf
    %512 = vmax.xlane.f32.xlu0 %v511
    %v513 = vpop.xlane.xlu0 %512
    %v514 = vsel %vm431, %v494, -inf
    %515 = vmax.xlane.f32.xlu0 %v514
    %v516 = vpop.xlane.xlu0 %515
    %v517 = vsel %vm431, %v495, -inf
    %518 = vmax.xlane.f32.xlu0 %v517
    %v519 = vpop.xlane.xlu0 %518
    %v520 = vsub.f32 %v488, %v498
    %v521 = vsub.f32 %v489, %v501
    %v522 = vsub.f32 %v490, %v504
    %v523 = vsub.f32 %v491, %v507
    %v524 = vsub.f32 %v492, %v510
    %v525 = vsub.f32 %v493, %v513
    %v526 = vsub.f32 %v494, %v516
    %v527 = vsub.f32 %v495, %v519
    %v528 = vmul.f32 %v520, 1.442695
    %v529 = vpow.pop %v528
    %v530 = vmul.f32 %v521, 1.442695
    %v531 = vpow.pop %v530
    %v532 = vmul.f32 %v522, 1.442695
    %v533 = vpow.pop %v532
    %v534 = vmul.f32 %v523, 1.442695
    %v535 = vpow.pop %v534
    %v536 = vmul.f32 %v524, 1.442695
    %v537 = vpow.pop %v536
    %v538 = vmul.f32 %v525, 1.442695
    %v539 = vpow.pop %v538
    %v540 = vmul.f32 %v526, 1.442695
    %v541 = vpow.pop %v540
    %v542 = vmul.f32 %v527, 1.442695
    %v543 = vpow.pop %v542
    %v544 = vsel %vm431, %v529, 0.0
    %545 = vadd.xlane.f32.xlu0 %v544
    %v546 = vpop.xlane.xlu0 %545
    %v547 = vsel %vm431, %v531, 0.0
    %548 = vadd.xlane.f32.xlu0 %v547
    %v549 = vpop.xlane.xlu0 %548
    %v550 = vsel %vm431, %v533, 0.0
    %551 = vadd.xlane.f32.xlu0 %v550
    %v552 = vpop.xlane.xlu0 %551
    %v553 = vsel %vm431, %v535, 0.0
    %554 = vadd.xlane.f32.xlu0 %v553
    %v555 = vpop.xlane.xlu0 %554
    %v556 = vsel %vm431, %v537, 0.0
    %557 = vadd.xlane.f32.xlu0 %v556
    %v558 = vpop.xlane.xlu0 %557
    %v559 = vsel %vm431, %v539, 0.0
    %560 = vadd.xlane.f32.xlu0 %v559
    %v561 = vpop.xlane.xlu0 %560
    %v562 = vsel %vm431, %v541, 0.0
    %563 = vadd.xlane.f32.xlu0 %v562
    %v564 = vpop.xlane.xlu0 %563
    %v565 = vsel %vm431, %v543, 0.0
    %566 = vadd.xlane.f32.xlu0 %v565
    %v567 = vpop.xlane.xlu0 %566
    %v568 = vrcp.pop %v546
    %v569 = vrcp.pop %v549
    %v570 = vrcp.pop %v552
    %v571 = vrcp.pop %v555
    %v572 = vrcp.pop %v558
    %v573 = vrcp.pop %v561
    %v574 = vrcp.pop %v564
    %v575 = vrcp.pop %v567
    %v576 = vmul.f32 %v529, %v568
    %v577 = vmul.f32 %v531, %v569
    %v578 = vmul.f32 %v533, %v570
    %v579 = vmul.f32 %v535, %v571
    %v580 = vmul.f32 %v537, %v572
    %v581 = vmul.f32 %v539, %v573
    %v582 = vmul.f32 %v541, %v574
    %v583 = vmul.f32 %v543, %v575
    %584 = vrot.lane.b32.xlu0 %v137, 112
    %v585 = vpop.permute.xlu0 %584
    %586 = vrot.lane.b32.xlu0 %v142, 112
    %v587 = vpop.permute.xlu0 %586
    %588 = vrot.lane.b32.xlu0 %v147, 112
    %v589 = vpop.permute.xlu0 %588
    %590 = vrot.lane.b32.xlu0 %v152, 112
    %v591 = vpop.permute.xlu0 %590
    %592 = vrot.lane.b32.xlu0 %v235, 112
    %v593 = vpop.permute.xlu0 %592
    %594 = vrot.lane.b32.xlu0 %v240, 112
    %v595 = vpop.permute.xlu0 %594
    %596 = vrot.lane.b32.xlu0 %v245, 112
    %v597 = vpop.permute.xlu0 %596
    %598 = vrot.lane.b32.xlu0 %v250, 112
    %v599 = vpop.permute.xlu0 %598
    %v609 = vsel %vm431, %v576, 0
    %v612 = vsel %vm431, %v577, 0
    %v615 = vsel %vm431, %v578, 0
    %v618 = vsel %vm431, %v579, 0
    %v621 = vsel %vm431, %v580, 0
    %v624 = vsel %vm431, %v581, 0
    %v627 = vsel %vm431, %v582, 0
    %v630 = vsel %vm431, %v583, 0
    %632 = vmatprep.subr.mxu0 0.0
    %633 = vmatpush1.msra.mxu0 %v585
    %634 = vmatprep.subr.mxu0 0.0
    %635 = vmatpush1.msra.mxu0 %v587
    %636 = vmatprep.subr.mxu0 0.0
    %637 = vmatpush1.msra.mxu0 %v589
    %638 = vmatprep.subr.mxu0 0.0
    %639 = vmatpush1.msra.mxu0 %v591
    %640 = vmatprep.subr.mxu0 0.0
    %641 = vmatpush1.msra.mxu0 %v593
    %642 = vmatprep.subr.mxu0 0.0
    %643 = vmatpush1.msra.mxu0 %v595
    %644 = vmatprep.subr.mxu0 0.0
    %645 = vmatpush1.msra.mxu0 %v597
    %646 = vmatprep.subr.mxu0 0.0
    %647 = vmatpush1.msra.mxu0 %v599
    %648 = vmatprep.subr.mxu0 0.0
    %649 = vmatpush1.msra.mxu0 0.0
    %650 = vmatprep.subr.mxu0 0.0
    %651 = vmatpush1.msra.mxu0 0.0
    %652 = vmatprep.subr.mxu0 0.0
    %653 = vmatpush1.msra.mxu0 0.0
    %654 = vmatprep.subr.mxu0 0.0
    %655 = vmatpush1.msra.mxu0 0.0
    %656 = vmatprep.subr.mxu0 0.0
    %657 = vmatpush1.msra.mxu0 0.0
    %658 = vmatprep.subr.mxu0 0.0
    %659 = vmatpush1.msra.mxu0 0.0
    %660 = vmatprep.subr.mxu0 0.0
    %661 = vmatpush1.msra.mxu0 0.0
    %662 = vmatprep.subr.mxu0 0.0
    %663 = vmatpush1.msra.mxu0 0.0
    %664 = vmatprep.subr.mxu0 0.0
    %665 = vmatpush1.msra.mxu0 0.0
    %666 = vmatprep.subr.mxu0 0.0
    %667 = vmatpush1.msra.mxu0 0.0
    %668 = vmatprep.subr.mxu0 0.0
    %669 = vmatpush1.msra.mxu0 0.0
    %670 = vmatprep.subr.mxu0 0.0
    %671 = vmatpush1.msra.mxu0 0.0
    %672 = vmatprep.subr.mxu0 0.0
    %673 = vmatpush1.msra.mxu0 0.0
    %674 = vmatprep.subr.mxu0 0.0
    %675 = vmatpush1.msra.mxu0 0.0
    %676 = vmatprep.subr.mxu0 0.0
    %677 = vmatpush1.msra.mxu0 0.0
    %678 = vmatprep.subr.mxu0 0.0
    %679 = vmatpush1.msra.mxu0 0.0
    %680 = vmatprep.subr.mxu0 0.0
    %681 = vmatpush1.msra.mxu0 0.0
    %682 = vmatprep.subr.mxu0 0.0
    %683 = vmatpush1.msra.mxu0 0.0
    %684 = vmatprep.subr.mxu0 0.0
    %685 = vmatpush1.msra.mxu0 0.0
    %686 = vmatprep.subr.mxu0 0.0
    %687 = vmatpush1.msra.mxu0 0.0
    %688 = vmatprep.subr.mxu0 0.0
    %689 = vmatpush1.msra.mxu0 0.0
    %690 = vmatprep.subr.mxu0 0.0
    %691 = vmatpush1.msra.mxu0 0.0
    %692 = vmatprep.subr.mxu0 0.0
    %693 = vmatpush1.msra.mxu0 0.0
    %694 = vmatprep.subr.mxu0 0.0
    %695 = vmatpush1.msra.mxu0 0.0
    %696 = vmatprep.mubr.f32.mxu0 0.0
    %697 = vmatmul.mubr.f32.gmra.mrb[0].mxu0 %v609
    %v698 = vpop.f32.mrb[0].mxu0
    %v699 = vadd.f32 0.0, %v698
    %v700 = vpop.f32.mrb[0].mxu0
    %701 = vmatprep.mubr.f32.mxu0 0.0
    %702 = vmatmul.mubr.f32.gmra.mrb[0].mxu0 %v612
    %v703 = vpop.f32.mrb[0].mxu0
    %v704 = vadd.f32 0.0, %v703
    %v705 = vpop.f32.mrb[0].mxu0
    %706 = vmatprep.mubr.f32.mxu0 0.0
    %707 = vmatmul.mubr.f32.gmra.mrb[0].mxu0 %v615
    %v708 = vpop.f32.mrb[0].mxu0
    %v709 = vadd.f32 0.0, %v708
    %v710 = vpop.f32.mrb[0].mxu0
    %711 = vmatprep.mubr.f32.mxu0 0.0
    %712 = vmatmul.mubr.f32.gmra.mrb[0].mxu0 %v618
    %v713 = vpop.f32.mrb[0].mxu0
    %v714 = vadd.f32 0.0, %v713
    %v715 = vpop.f32.mrb[0].mxu0
    %716 = vmatprep.mubr.f32.mxu0 0.0
    %717 = vmatmul.mubr.f32.gmra.mrb[0].mxu0 %v621
    %v718 = vpop.f32.mrb[0].mxu0
    %v719 = vadd.f32 0.0, %v718
    %v720 = vpop.f32.mrb[0].mxu0
    %721 = vmatprep.mubr.f32.mxu0 0.0
    %722 = vmatmul.mubr.f32.gmra.mrb[0].mxu0 %v624
    %v723 = vpop.f32.mrb[0].mxu0
    %v724 = vadd.f32 0.0, %v723
    %v725 = vpop.f32.mrb[0].mxu0
    %726 = vmatprep.mubr.f32.mxu0 0.0
    %727 = vmatmul.mubr.f32.gmra.mrb[0].mxu0 %v627
    %v728 = vpop.f32.mrb[0].mxu0
    %v729 = vadd.f32 0.0, %v728
    %v730 = vpop.f32.mrb[0].mxu0
    %731 = vmatprep.mubr.f32.mxu0 0.0
    %732 = vmatmul.mubr.f32.gmra.mrb[0].mxu0 %v630
    %v733 = vpop.f32.mrb[0].mxu0
    %v734 = vadd.f32 0.0, %v733
    %v735 = vpop.f32.mrb[0].mxu0
    %736 = vdwg.mxu0
    %v737 = vld [vmem:[%s3] sm:$0xff]
    %s738 = scalar_lea.vmem %s3, 8
    %v739 = vld [vmem:[%s738] sm:$0xff]
    %v741 = vsel %vm277, %v719, 0
    %v744 = vsel %vm277, %v724, 0
    %v747 = vsel %vm277, %v729, 0
    %v750 = vsel %vm277, %v734, 0
    %752 = vmatprep.subr.mxu0 0.0
    %753 = vmatpush1.msra.mxu0 %v739
    %754 = vmatprep.subr.mxu0 0.0
    %755 = vmatpush1.msra.mxu0 0.0
    %756 = vmatprep.subr.mxu0 0.0
    %757 = vmatpush1.msra.mxu0 0.0
    %758 = vmatprep.subr.mxu0 0.0
    %759 = vmatpush1.msra.mxu0 0.0
    %760 = vmatprep.subr.mxu0 0.0
    %761 = vmatpush1.msra.mxu0 0.0
    %762 = vmatprep.subr.mxu0 0.0
    %763 = vmatpush1.msra.mxu0 0.0
    %764 = vmatprep.subr.mxu0 0.0
    %765 = vmatpush1.msra.mxu0 0.0
    %766 = vmatprep.subr.mxu0 0.0
    %767 = vmatpush1.msra.mxu0 0.0
    %768 = vmatprep.subr.mxu0 0.0
    %769 = vmatpush1.msra.mxu0 0.0
    %770 = vmatprep.subr.mxu0 0.0
    %771 = vmatpush1.msra.mxu0 0.0
    %772 = vmatprep.subr.mxu0 0.0
    %773 = vmatpush1.msra.mxu0 0.0
    %774 = vmatprep.subr.mxu0 0.0
    %775 = vmatpush1.msra.mxu0 0.0
    %776 = vmatprep.subr.mxu0 0.0
    %777 = vmatpush1.msra.mxu0 0.0
    %778 = vmatprep.subr.mxu0 0.0
    %779 = vmatpush1.msra.mxu0 0.0
    %780 = vmatprep.subr.mxu0 0.0
    %781 = vmatpush1.msra.mxu0 0.0
    %782 = vmatprep.subr.mxu0 0.0
    %783 = vmatpush1.msra.mxu0 0.0
    %784 = vmatprep.subr.mxu0 0.0
    %785 = vmatpush1.msra.mxu0 0.0
    %786 = vmatprep.subr.mxu0 0.0
    %787 = vmatpush1.msra.mxu0 0.0
    %788 = vmatprep.subr.mxu0 0.0
    %789 = vmatpush1.msra.mxu0 0.0
    %790 = vmatprep.subr.mxu0 0.0
    %791 = vmatpush1.msra.mxu0 0.0
    %792 = vmatprep.subr.mxu0 0.0
    %793 = vmatpush1.msra.mxu0 0.0
    %794 = vmatprep.subr.mxu0 0.0
    %795 = vmatpush1.msra.mxu0 0.0
    %796 = vmatprep.subr.mxu0 0.0
    %797 = vmatpush1.msra.mxu0 0.0
    %798 = vmatprep.subr.mxu0 0.0
    %799 = vmatpush1.msra.mxu0 0.0
    %800 = vmatprep.subr.mxu0 0.0
    %801 = vmatpush1.msra.mxu0 0.0
    %802 = vmatprep.subr.mxu0 0.0
    %803 = vmatpush1.msra.mxu0 0.0
    %804 = vmatprep.subr.mxu0 0.0
    %805 = vmatpush1.msra.mxu0 0.0
    %806 = vmatprep.subr.mxu0 0.0
    %807 = vmatpush1.msra.mxu0 0.0
    %808 = vmatprep.subr.mxu0 0.0
    %809 = vmatpush1.msra.mxu0 0.0
    %810 = vmatprep.subr.mxu0 0.0
    %811 = vmatpush1.msra.mxu0 0.0
    %812 = vmatprep.subr.mxu0 0.0
    %813 = vmatpush1.msra.mxu0 0.0
    %814 = vmatprep.subr.mxu0 0.0
    %815 = vmatpush1.msra.mxu0 0.0
    %816 = vmatprep.mubr.f32.mxu0 0.0
    %817 = vmatmul.mubr.f32.gmra.mrb[0].mxu0 %v741
    %v818 = vpop.f32.mrb[0].mxu0
    %v819 = vadd.f32 0.0, %v818
    %v820 = vpop.f32.mrb[0].mxu0
    %821 = vmatprep.mubr.f32.mxu0 0.0
    %822 = vmatmul.mubr.f32.gmra.mrb[0].mxu0 %v744
    %v823 = vpop.f32.mrb[0].mxu0
    %v824 = vadd.f32 0.0, %v823
    %v825 = vpop.f32.mrb[0].mxu0
    %826 = vmatprep.mubr.f32.mxu0 0.0
    %827 = vmatmul.mubr.f32.gmra.mrb[0].mxu0 %v747
    %v828 = vpop.f32.mrb[0].mxu0
    %v829 = vadd.f32 0.0, %v828
    %v830 = vpop.f32.mrb[0].mxu0
    %831 = vmatprep.mubr.f32.mxu0 0.0
    %832 = vmatmul.mubr.f32.gmra.mrb[0].mxu0 %v750
    %v833 = vpop.f32.mrb[0].mxu0
    %v834 = vadd.f32 0.0, %v833
    %v835 = vpop.f32.mrb[0].mxu0
    %836 = vdwg.mxu0
    %v838 = vsel %vm277, %v699, 0
    %v841 = vsel %vm277, %v704, 0
    %v844 = vsel %vm277, %v709, 0
    %v847 = vsel %vm277, %v714, 0
    %849 = vmatprep.subr.mxu0 0.0
    %850 = vmatpush1.msra.mxu0 %v737
    %851 = vmatprep.subr.mxu0 0.0
    %852 = vmatpush1.msra.mxu0 0.0
    %853 = vmatprep.subr.mxu0 0.0
    %854 = vmatpush1.msra.mxu0 0.0
    %855 = vmatprep.subr.mxu0 0.0
    %856 = vmatpush1.msra.mxu0 0.0
    %857 = vmatprep.subr.mxu0 0.0
    %858 = vmatpush1.msra.mxu0 0.0
    %859 = vmatprep.subr.mxu0 0.0
    %860 = vmatpush1.msra.mxu0 0.0
    %861 = vmatprep.subr.mxu0 0.0
    %862 = vmatpush1.msra.mxu0 0.0
    %863 = vmatprep.subr.mxu0 0.0
    %864 = vmatpush1.msra.mxu0 0.0
    %865 = vmatprep.subr.mxu0 0.0
    %866 = vmatpush1.msra.mxu0 0.0
    %867 = vmatprep.subr.mxu0 0.0
    %868 = vmatpush1.msra.mxu0 0.0
    %869 = vmatprep.subr.mxu0 0.0
    %870 = vmatpush1.msra.mxu0 0.0
    %871 = vmatprep.subr.mxu0 0.0
    %872 = vmatpush1.msra.mxu0 0.0
    %873 = vmatprep.subr.mxu0 0.0
    %874 = vmatpush1.msra.mxu0 0.0
    %875 = vmatprep.subr.mxu0 0.0
    %876 = vmatpush1.msra.mxu0 0.0
    %877 = vmatprep.subr.mxu0 0.0
    %878 = vmatpush1.msra.mxu0 0.0
    %879 = vmatprep.subr.mxu0 0.0
    %880 = vmatpush1.msra.mxu0 0.0
    %881 = vmatprep.subr.mxu0 0.0
    %882 = vmatpush1.msra.mxu0 0.0
    %883 = vmatprep.subr.mxu0 0.0
    %884 = vmatpush1.msra.mxu0 0.0
    %885 = vmatprep.subr.mxu0 0.0
    %886 = vmatpush1.msra.mxu0 0.0
    %887 = vmatprep.subr.mxu0 0.0
    %888 = vmatpush1.msra.mxu0 0.0
    %889 = vmatprep.subr.mxu0 0.0
    %890 = vmatpush1.msra.mxu0 0.0
    %891 = vmatprep.subr.mxu0 0.0
    %892 = vmatpush1.msra.mxu0 0.0
    %893 = vmatprep.subr.mxu0 0.0
    %894 = vmatpush1.msra.mxu0 0.0
    %895 = vmatprep.subr.mxu0 0.0
    %896 = vmatpush1.msra.mxu0 0.0
    %897 = vmatprep.subr.mxu0 0.0
    %898 = vmatpush1.msra.mxu0 0.0
    %899 = vmatprep.subr.mxu0 0.0
    %900 = vmatpush1.msra.mxu0 0.0
    %901 = vmatprep.subr.mxu0 0.0
    %902 = vmatpush1.msra.mxu0 0.0
    %903 = vmatprep.subr.mxu0 0.0
    %904 = vmatpush1.msra.mxu0 0.0
    %905 = vmatprep.subr.mxu0 0.0
    %906 = vmatpush1.msra.mxu0 0.0
    %907 = vmatprep.subr.mxu0 0.0
    %908 = vmatpush1.msra.mxu0 0.0
    %909 = vmatprep.subr.mxu0 0.0
    %910 = vmatpush1.msra.mxu0 0.0
    %911 = vmatprep.subr.mxu0 0.0
    %912 = vmatpush1.msra.mxu0 0.0
    %913 = vmatprep.mubr.f32.mxu0 0.0
    %914 = vmatmul.mubr.f32.gmra.mrb[0].mxu0 %v838
    %v915 = vpop.f32.mrb[0].mxu0
    %v916 = vadd.f32 %v819, %v915
    %v917 = vpop.f32.mrb[0].mxu0
    %918 = vmatprep.mubr.f32.mxu0 0.0
    %919 = vmatmul.mubr.f32.gmra.mrb[0].mxu0 %v841
    %v920 = vpop.f32.mrb[0].mxu0
    %v921 = vadd.f32 %v824, %v920
    %v922 = vpop.f32.mrb[0].mxu0
    %923 = vmatprep.mubr.f32.mxu0 0.0
    %924 = vmatmul.mubr.f32.gmra.mrb[0].mxu0 %v844
    %v925 = vpop.f32.mrb[0].mxu0
    %v926 = vadd.f32 %v829, %v925
    %v927 = vpop.f32.mrb[0].mxu0
    %928 = vmatprep.mubr.f32.mxu0 0.0
    %929 = vmatmul.mubr.f32.gmra.mrb[0].mxu0 %v847
    %v930 = vpop.f32.mrb[0].mxu0
    %v931 = vadd.f32 %v834, %v930
    %v932 = vpop.f32.mrb[0].mxu0
    %933 = vdwg.mxu0
    %v934 = vld [vmem:[%s4] sm:$0x1]
    %v936 = vlaneseq
    %v937 = vshrl.u32 %v936, 7
    %v938 = vsub.s32 0, %v937
    %v939 = vrot.slane %v934, %v938
    %v941 = vadd.f32 %v916, %v939
    %v942 = vadd.f32 %v921, %v939
    %v943 = vadd.f32 %v926, %v939
    %v944 = vadd.f32 %v931, %v939
    %v945 = vadd.f32 %v42, %v941
    %v946 = vadd.f32 %v43, %v942
    %v947 = vadd.f32 %v44, %v943
    %v948 = vadd.f32 %v45, %v944
    %v949 = vsel %vm57, %v945, 0.0
    %950 = vadd.xlane.f32.xlu0 %v949
    %v951 = vpop.xlane.xlu0 %950
    %v952 = vsel %vm57, %v946, 0.0
    %953 = vadd.xlane.f32.xlu0 %v952
    %v954 = vpop.xlane.xlu0 %953
    %v955 = vsel %vm57, %v947, 0.0
    %956 = vadd.xlane.f32.xlu0 %v955
    %v957 = vpop.xlane.xlu0 %956
    %v958 = vsel %vm57, %v948, 0.0
    %959 = vadd.xlane.f32.xlu0 %v958
    %v960 = vpop.xlane.xlu0 %959
    %v961 = vrcp.pop 32.0
    %v962 = vmul.f32 %v951, %v961
    %v963 = vmul.f32 %v954, %v961
    %v964 = vmul.f32 %v957, %v961
    %v965 = vmul.f32 %v960, %v961
    %v966 = vsub.f32 %v945, %v962
    %v967 = vsub.f32 %v946, %v963
    %v968 = vsub.f32 %v947, %v964
    %v969 = vsub.f32 %v948, %v965
    %v970 = vmul.f32 %v966, %v966
    %v971 = vmul.f32 %v967, %v967
    %v972 = vmul.f32 %v968, %v968
    %v973 = vmul.f32 %v969, %v969
    %v974 = vsel %vm57, %v970, 0.0
    %975 = vadd.xlane.f32.xlu0 %v974
    %v976 = vpop.xlane.xlu0 %975
    %v977 = vsel %vm57, %v971, 0.0
    %978 = vadd.xlane.f32.xlu0 %v977
    %v979 = vpop.xlane.xlu0 %978
    %v980 = vsel %vm57, %v972, 0.0
    %981 = vadd.xlane.f32.xlu0 %v980
    %v982 = vpop.xlane.xlu0 %981
    %v983 = vsel %vm57, %v973, 0.0
    %984 = vadd.xlane.f32.xlu0 %v983
    %v985 = vpop.xlane.xlu0 %984
    %v986 = vmul.f32 %v976, %v961
    %v987 = vmul.f32 %v979, %v961
    %v988 = vmul.f32 %v982, %v961
    %v989 = vmul.f32 %v985, %v961
    %v990 = vadd.f32 %v986, 1e-05
    %v991 = vadd.f32 %v987, 1e-05
    %v992 = vadd.f32 %v988, 1e-05
    %v993 = vadd.f32 %v989, 1e-05
    %v994 = vrsqrt.pop %v990
    %v995 = vrsqrt.pop %v991
    %v996 = vrsqrt.pop %v992
    %v997 = vrsqrt.pop %v993
    %v998 = vmul.f32 %v966, %v994
    %v999 = vmul.f32 %v967, %v995
    %v1000 = vmul.f32 %v968, %v996
    %v1001 = vmul.f32 %v969, %v997
    %v1002 = vld [vmem:[%s7] sm:$0xff]
    %v1003 = vld [vmem:[%s7 + $0x8] sm:$0xff]
    %v1004 = vld [vmem:[%s7 + $0x10] sm:$0xff]
    %v1005 = vld [vmem:[%s7 + $0x18] sm:$0xff]
    %v1006 = vld [vmem:[%s7 + $0x20] sm:$0xff]
    %v1007 = vld [vmem:[%s7 + $0x28] sm:$0xff]
    %v1008 = vld [vmem:[%s7 + $0x30] sm:$0xff]
    %v1009 = vld [vmem:[%s7 + $0x38] sm:$0xff]
    %v1010 = vld [vmem:[%s7 + $0x40] sm:$0xff]
    %v1011 = vld [vmem:[%s7 + $0x48] sm:$0xff]
    %v1012 = vld [vmem:[%s7 + $0x50] sm:$0xff]
    %v1013 = vld [vmem:[%s7 + $0x58] sm:$0xff]
    %v1014 = vld [vmem:[%s7 + $0x60] sm:$0xff]
    %v1015 = vld [vmem:[%s7 + $0x68] sm:$0xff]
    %v1016 = vld [vmem:[%s7 + $0x70] sm:$0xff]
    %v1017 = vld [vmem:[%s7 + $0x78] sm:$0xff]
    %v1019 = vsel %vm57, %v998, 0
    %v1022 = vsel %vm57, %v999, 0
    %v1025 = vsel %vm57, %v1000, 0
    %v1028 = vsel %vm57, %v1001, 0
    %1030 = vmatprep.subr.mxu0 %v1003
    %1031 = vmatpush1.msra.mxu0 %v1002
    %1032 = vmatprep.subr.mxu0 %v1007
    %1033 = vmatpush1.msra.mxu0 %v1006
    %1034 = vmatprep.subr.mxu0 %v1011
    %1035 = vmatpush1.msra.mxu0 %v1010
    %1036 = vmatprep.subr.mxu0 %v1015
    %1037 = vmatpush1.msra.mxu0 %v1014
    %1038 = vmatprep.subr.mxu0 0.0
    %1039 = vmatpush1.msra.mxu0 0.0
    %1040 = vmatprep.subr.mxu0 0.0
    %1041 = vmatpush1.msra.mxu0 0.0
    %1042 = vmatprep.subr.mxu0 0.0
    %1043 = vmatpush1.msra.mxu0 0.0
    %1044 = vmatprep.subr.mxu0 0.0
    %1045 = vmatpush1.msra.mxu0 0.0
    %1046 = vmatprep.subr.mxu0 0.0
    %1047 = vmatpush1.msra.mxu0 0.0
    %1048 = vmatprep.subr.mxu0 0.0
    %1049 = vmatpush1.msra.mxu0 0.0
    %1050 = vmatprep.subr.mxu0 0.0
    %1051 = vmatpush1.msra.mxu0 0.0
    %1052 = vmatprep.subr.mxu0 0.0
    %1053 = vmatpush1.msra.mxu0 0.0
    %1054 = vmatprep.subr.mxu0 0.0
    %1055 = vmatpush1.msra.mxu0 0.0
    %1056 = vmatprep.subr.mxu0 0.0
    %1057 = vmatpush1.msra.mxu0 0.0
    %1058 = vmatprep.subr.mxu0 0.0
    %1059 = vmatpush1.msra.mxu0 0.0
    %1060 = vmatprep.subr.mxu0 0.0
    %1061 = vmatpush1.msra.mxu0 0.0
    %1062 = vmatprep.subr.mxu0 0.0
    %1063 = vmatpush1.msra.mxu0 0.0
    %1064 = vmatprep.subr.mxu0 0.0
    %1065 = vmatpush1.msra.mxu0 0.0
    %1066 = vmatprep.subr.mxu0 0.0
    %1067 = vmatpush1.msra.mxu0 0.0
    %1068 = vmatprep.subr.mxu0 0.0
    %1069 = vmatpush1.msra.mxu0 0.0
    %1070 = vmatprep.subr.mxu0 0.0
    %1071 = vmatpush1.msra.mxu0 0.0
    %1072 = vmatprep.subr.mxu0 0.0
    %1073 = vmatpush1.msra.mxu0 0.0
    %1074 = vmatprep.subr.mxu0 0.0
    %1075 = vmatpush1.msra.mxu0 0.0
    %1076 = vmatprep.subr.mxu0 0.0
    %1077 = vmatpush1.msra.mxu0 0.0
    %1078 = vmatprep.subr.mxu0 0.0
    %1079 = vmatpush1.msra.mxu0 0.0
    %1080 = vmatprep.subr.mxu0 0.0
    %1081 = vmatpush1.msra.mxu0 0.0
    %1082 = vmatprep.subr.mxu0 0.0
    %1083 = vmatpush1.msra.mxu0 0.0
    %1084 = vmatprep.subr.mxu0 0.0
    %1085 = vmatpush1.msra.mxu0 0.0
    %1086 = vmatprep.subr.mxu0 0.0
    %1087 = vmatpush1.msra.mxu0 0.0
    %1088 = vmatprep.subr.mxu0 0.0
    %1089 = vmatpush1.msra.mxu0 0.0
    %1090 = vmatprep.subr.mxu0 0.0
    %1091 = vmatpush1.msra.mxu0 0.0
    %1092 = vmatprep.subr.mxu0 0.0
    %1093 = vmatpush1.msra.mxu0 0.0
    %1094 = vmatprep.mubr.f32.mxu0 0.0
    %1095 = vmatmul.mubr.f32.gmra.mrb[0].mxu0 %v1019
    %v1096 = vpop.f32.mrb[0].mxu0
    %v1097 = vadd.f32 0.0, %v1096
    %v1098 = vpop.f32.mrb[0].mxu0
    %v1099 = vadd.f32 0.0, %v1098
    %1100 = vmatprep.mubr.f32.mxu0 0.0
    %1101 = vmatmul.mubr.f32.gmra.mrb[0].mxu0 %v1022
    %v1102 = vpop.f32.mrb[0].mxu0
    %v1103 = vadd.f32 0.0, %v1102
    %v1104 = vpop.f32.mrb[0].mxu0
    %v1105 = vadd.f32 0.0, %v1104
    %1106 = vmatprep.mubr.f32.mxu0 0.0
    %1107 = vmatmul.mubr.f32.gmra.mrb[0].mxu0 %v1025
    %v1108 = vpop.f32.mrb[0].mxu0
    %v1109 = vadd.f32 0.0, %v1108
    %v1110 = vpop.f32.mrb[0].mxu0
    %v1111 = vadd.f32 0.0, %v1110
    %1112 = vmatprep.mubr.f32.mxu0 0.0
    %1113 = vmatmul.mubr.f32.gmra.mrb[0].mxu0 %v1028
    %v1114 = vpop.f32.mrb[0].mxu0
    %v1115 = vadd.f32 0.0, %v1114
    %v1116 = vpop.f32.mrb[0].mxu0
    %v1117 = vadd.f32 0.0, %v1116
    %1118 = vdwg.mxu0
    %1119 = vmatprep.subr.mxu0 %v1005
    %1120 = vmatpush1.msra.mxu0 %v1004
    %1121 = vmatprep.subr.mxu0 %v1009
    %1122 = vmatpush1.msra.mxu0 %v1008
    %1123 = vmatprep.subr.mxu0 %v1013
    %1124 = vmatpush1.msra.mxu0 %v1012
    %1125 = vmatprep.subr.mxu0 %v1017
    %1126 = vmatpush1.msra.mxu0 %v1016
    %1127 = vmatprep.subr.mxu0 0.0
    %1128 = vmatpush1.msra.mxu0 0.0
    %1129 = vmatprep.subr.mxu0 0.0
    %1130 = vmatpush1.msra.mxu0 0.0
    %1131 = vmatprep.subr.mxu0 0.0
    %1132 = vmatpush1.msra.mxu0 0.0
    %1133 = vmatprep.subr.mxu0 0.0
    %1134 = vmatpush1.msra.mxu0 0.0
    %1135 = vmatprep.subr.mxu0 0.0
    %1136 = vmatpush1.msra.mxu0 0.0
    %1137 = vmatprep.subr.mxu0 0.0
    %1138 = vmatpush1.msra.mxu0 0.0
    %1139 = vmatprep.subr.mxu0 0.0
    %1140 = vmatpush1.msra.mxu0 0.0
    %1141 = vmatprep.subr.mxu0 0.0
    %1142 = vmatpush1.msra.mxu0 0.0
    %1143 = vmatprep.subr.mxu0 0.0
    %1144 = vmatpush1.msra.mxu0 0.0
    %1145 = vmatprep.subr.mxu0 0.0
    %1146 = vmatpush1.msra.mxu0 0.0
    %1147 = vmatprep.subr.mxu0 0.0
    %1148 = vmatpush1.msra.mxu0 0.0
    %1149 = vmatprep.subr.mxu0 0.0
    %1150 = vmatpush1.msra.mxu0 0.0
    %1151 = vmatprep.subr.mxu0 0.0
    %1152 = vmatpush1.msra.mxu0 0.0
    %1153 = vmatprep.subr.mxu0 0.0
    %1154 = vmatpush1.msra.mxu0 0.0
    %1155 = vmatprep.subr.mxu0 0.0
    %1156 = vmatpush1.msra.mxu0 0.0
    %1157 = vmatprep.subr.mxu0 0.0
    %1158 = vmatpush1.msra.mxu0 0.0
    %1159 = vmatprep.subr.mxu0 0.0
    %1160 = vmatpush1.msra.mxu0 0.0
    %1161 = vmatprep.subr.mxu0 0.0
    %1162 = vmatpush1.msra.mxu0 0.0
    %1163 = vmatprep.subr.mxu0 0.0
    %1164 = vmatpush1.msra.mxu0 0.0
    %1165 = vmatprep.subr.mxu0 0.0
    %1166 = vmatpush1.msra.mxu0 0.0
    %1167 = vmatprep.subr.mxu0 0.0
    %1168 = vmatpush1.msra.mxu0 0.0
    %1169 = vmatprep.subr.mxu0 0.0
    %1170 = vmatpush1.msra.mxu0 0.0
    %1171 = vmatprep.subr.mxu0 0.0
    %1172 = vmatpush1.msra.mxu0 0.0
    %1173 = vmatprep.subr.mxu0 0.0
    %1174 = vmatpush1.msra.mxu0 0.0
    %1175 = vmatprep.subr.mxu0 0.0
    %1176 = vmatpush1.msra.mxu0 0.0
    %1177 = vmatprep.subr.mxu0 0.0
    %1178 = vmatpush1.msra.mxu0 0.0
    %1179 = vmatprep.subr.mxu0 0.0
    %1180 = vmatpush1.msra.mxu0 0.0
    %1181 = vmatprep.subr.mxu0 0.0
    %1182 = vmatpush1.msra.mxu0 0.0
    %1183 = vmatprep.mubr.f32.mxu0 0.0
    %1184 = vmatmul.mubr.f32.gmra.mrb[0].mxu0 %v1019
    %v1185 = vpop.f32.mrb[0].mxu0
    %v1186 = vadd.f32 0.0, %v1185
    %v1187 = vpop.f32.mrb[0].mxu0
    %v1188 = vadd.f32 0.0, %v1187
    %1189 = vmatprep.mubr.f32.mxu0 0.0
    %1190 = vmatmul.mubr.f32.gmra.mrb[0].mxu0 %v1022
    %v1191 = vpop.f32.mrb[0].mxu0
    %v1192 = vadd.f32 0.0, %v1191
    %v1193 = vpop.f32.mrb[0].mxu0
    %v1194 = vadd.f32 0.0, %v1193
    %1195 = vmatprep.mubr.f32.mxu0 0.0
    %1196 = vmatmul.mubr.f32.gmra.mrb[0].mxu0 %v1025
    %v1197 = vpop.f32.mrb[0].mxu0
    %v1198 = vadd.f32 0.0, %v1197
    %v1199 = vpop.f32.mrb[0].mxu0
    %v1200 = vadd.f32 0.0, %v1199
    %1201 = vmatprep.mubr.f32.mxu0 0.0
    %1202 = vmatmul.mubr.f32.gmra.mrb[0].mxu0 %v1028
    %v1203 = vpop.f32.mrb[0].mxu0
    %v1204 = vadd.f32 0.0, %v1203
    %v1205 = vpop.f32.mrb[0].mxu0
    %v1206 = vadd.f32 0.0, %v1205
    %1207 = vdwg.mxu0
    %v1208 = vld [vmem:[%s10] sm:$0xff]
    %v1209 = vld [vmem:[%s10 + $0x8] sm:$0xff]
    %v1210 = vld [vmem:[%s10 + $0x10] sm:$0xff]
    %v1211 = vld [vmem:[%s10 + $0x18] sm:$0xff]
    %v1212 = vld [vmem:[%s10 + $0x20] sm:$0xff]
    %v1213 = vld [vmem:[%s10 + $0x28] sm:$0xff]
    %v1214 = vld [vmem:[%s10 + $0x30] sm:$0xff]
    %v1215 = vld [vmem:[%s10 + $0x38] sm:$0xff]
    %v1216 = vld [vmem:[%s10 + $0x40] sm:$0xff]
    %v1217 = vld [vmem:[%s10 + $0x48] sm:$0xff]
    %v1218 = vld [vmem:[%s10 + $0x50] sm:$0xff]
    %v1219 = vld [vmem:[%s10 + $0x58] sm:$0xff]
    %v1220 = vld [vmem:[%s10 + $0x60] sm:$0xff]
    %v1221 = vld [vmem:[%s10 + $0x68] sm:$0xff]
    %v1222 = vld [vmem:[%s10 + $0x70] sm:$0xff]
    %v1223 = vld [vmem:[%s10 + $0x78] sm:$0xff]
    %v1224 = vmul.f32 %v1097, %v1208
    %v1225 = vmul.f32 %v1099, %v1209
    %v1226 = vmul.f32 %v1186, %v1210
    %v1227 = vmul.f32 %v1188, %v1211
    %v1228 = vmul.f32 %v1103, %v1212
    %v1229 = vmul.f32 %v1105, %v1213
    %v1230 = vmul.f32 %v1192, %v1214
    %v1231 = vmul.f32 %v1194, %v1215
    %v1232 = vmul.f32 %v1109, %v1216
    %v1233 = vmul.f32 %v1111, %v1217
    %v1234 = vmul.f32 %v1198, %v1218
    %v1235 = vmul.f32 %v1200, %v1219
    %v1236 = vmul.f32 %v1115, %v1220
    %v1237 = vmul.f32 %v1117, %v1221
    %v1238 = vmul.f32 %v1204, %v1222
    %v1239 = vmul.f32 %v1206, %v1223
    %v1240 = vld [vmem:[%s8] sm:$0xff]
    %v1241 = vld [vmem:[%s8 + $0x8] sm:$0xff]
    %v1242 = vld [vmem:[%s8 + $0x10] sm:$0xff]
    %v1243 = vld [vmem:[%s8 + $0x18] sm:$0xff]
    %v1244 = vld [vmem:[%s8 + $0x20] sm:$0xff]
    %v1245 = vld [vmem:[%s8 + $0x28] sm:$0xff]
    %v1246 = vld [vmem:[%s8 + $0x30] sm:$0xff]
    %v1247 = vld [vmem:[%s8 + $0x38] sm:$0xff]
    %v1248 = vld [vmem:[%s8 + $0x40] sm:$0xff]
    %v1249 = vld [vmem:[%s8 + $0x48] sm:$0xff]
    %v1250 = vld [vmem:[%s8 + $0x50] sm:$0xff]
    %v1251 = vld [vmem:[%s8 + $0x58] sm:$0xff]
    %v1252 = vld [vmem:[%s8 + $0x60] sm:$0xff]
    %v1253 = vld [vmem:[%s8 + $0x68] sm:$0xff]
    %v1254 = vld [vmem:[%s8 + $0x70] sm:$0xff]
    %v1255 = vld [vmem:[%s8 + $0x78] sm:$0xff]
    %v1256 = vld [vmem:[%s8 + $0x80] sm:$0xff]
    %v1257 = vld [vmem:[%s8 + $0x88] sm:$0xff]
    %v1258 = vld [vmem:[%s8 + $0x90] sm:$0xff]
    %v1259 = vld [vmem:[%s8 + $0x98] sm:$0xff]
    %v1260 = vld [vmem:[%s8 + $0xa0] sm:$0xff]
    %v1261 = vld [vmem:[%s8 + $0xa8] sm:$0xff]
    %v1262 = vld [vmem:[%s8 + $0xb0] sm:$0xff]
    %v1263 = vld [vmem:[%s8 + $0xb8] sm:$0xff]
    %v1264 = vld [vmem:[%s8 + $0xc0] sm:$0xff]
    %v1265 = vld [vmem:[%s8 + $0xc8] sm:$0xff]
    %v1266 = vld [vmem:[%s8 + $0xd0] sm:$0xff]
    %v1267 = vld [vmem:[%s8 + $0xd8] sm:$0xff]
    %v1268 = vld [vmem:[%s8 + $0xe0] sm:$0xff]
    %v1269 = vld [vmem:[%s8 + $0xe8] sm:$0xff]
    %v1270 = vld [vmem:[%s8 + $0xf0] sm:$0xff]
    %v1271 = vld [vmem:[%s8 + $0xf8] sm:$0xff]
    %v1272 = vld [vmem:[%s8 + $0x100] sm:$0xff]
    %v1273 = vld [vmem:[%s8 + $0x108] sm:$0xff]
    %v1274 = vld [vmem:[%s8 + $0x110] sm:$0xff]
    %v1275 = vld [vmem:[%s8 + $0x118] sm:$0xff]
    %v1276 = vld [vmem:[%s8 + $0x120] sm:$0xff]
    %v1277 = vld [vmem:[%s8 + $0x128] sm:$0xff]
    %v1278 = vld [vmem:[%s8 + $0x130] sm:$0xff]
    %v1279 = vld [vmem:[%s8 + $0x138] sm:$0xff]
    %v1280 = vld [vmem:[%s8 + $0x140] sm:$0xff]
    %v1281 = vld [vmem:[%s8 + $0x148] sm:$0xff]
    %v1282 = vld [vmem:[%s8 + $0x150] sm:$0xff]
    %v1283 = vld [vmem:[%s8 + $0x158] sm:$0xff]
    %v1284 = vld [vmem:[%s8 + $0x160] sm:$0xff]
    %v1285 = vld [vmem:[%s8 + $0x168] sm:$0xff]
    %v1286 = vld [vmem:[%s8 + $0x170] sm:$0xff]
    %v1287 = vld [vmem:[%s8 + $0x178] sm:$0xff]
    %v1288 = vld [vmem:[%s8 + $0x180] sm:$0xff]
    %v1289 = vld [vmem:[%s8 + $0x188] sm:$0xff]
    %v1290 = vld [vmem:[%s8 + $0x190] sm:$0xff]
    %v1291 = vld [vmem:[%s8 + $0x198] sm:$0xff]
    %v1292 = vld [vmem:[%s8 + $0x1a0] sm:$0xff]
    %v1293 = vld [vmem:[%s8 + $0x1a8] sm:$0xff]
    %v1294 = vld [vmem:[%s8 + $0x1b0] sm:$0xff]
    %v1295 = vld [vmem:[%s8 + $0x1b8] sm:$0xff]
    %v1296 = vld [vmem:[%s8 + $0x1c0] sm:$0xff]
    %v1297 = vld [vmem:[%s8 + $0x1c8] sm:$0xff]
    %v1298 = vld [vmem:[%s8 + $0x1d0] sm:$0xff]
    %v1299 = vld [vmem:[%s8 + $0x1d8] sm:$0xff]
    %v1300 = vld [vmem:[%s8 + $0x1e0] sm:$0xff]
    %v1301 = vld [vmem:[%s8 + $0x1e8] sm:$0xff]
    %v1302 = vld [vmem:[%s8 + $0x1f0] sm:$0xff]
    %v1303 = vld [vmem:[%s8 + $0x1f8] sm:$0xff]
    %1304 = vmatprep.subr.mxu0 0.0
    %1305 = vmatpush1.msra.mxu0 %v1240
    %1306 = vmatprep.subr.mxu0 0.0
    %1307 = vmatpush1.msra.mxu0 %v1241
    %1308 = vmatprep.subr.mxu0 0.0
    %1309 = vmatpush1.msra.mxu0 %v1242
    %1310 = vmatprep.subr.mxu0 0.0
    %1311 = vmatpush1.msra.mxu0 %v1243
    %1312 = vmatprep.subr.mxu0 0.0
    %1313 = vmatpush1.msra.mxu0 %v1244
    %1314 = vmatprep.subr.mxu0 0.0
    %1315 = vmatpush1.msra.mxu0 %v1245
    %1316 = vmatprep.subr.mxu0 0.0
    %1317 = vmatpush1.msra.mxu0 %v1246
    %1318 = vmatprep.subr.mxu0 0.0
    %1319 = vmatpush1.msra.mxu0 %v1247
    %1320 = vmatprep.subr.mxu0 0.0
    %1321 = vmatpush1.msra.mxu0 %v1248
    %1322 = vmatprep.subr.mxu0 0.0
    %1323 = vmatpush1.msra.mxu0 %v1249
    %1324 = vmatprep.subr.mxu0 0.0
    %1325 = vmatpush1.msra.mxu0 %v1250
    %1326 = vmatprep.subr.mxu0 0.0
    %1327 = vmatpush1.msra.mxu0 %v1251
    %1328 = vmatprep.subr.mxu0 0.0
    %1329 = vmatpush1.msra.mxu0 %v1252
    %1330 = vmatprep.subr.mxu0 0.0
    %1331 = vmatpush1.msra.mxu0 %v1253
    %1332 = vmatprep.subr.mxu0 0.0
    %1333 = vmatpush1.msra.mxu0 %v1254
    %1334 = vmatprep.subr.mxu0 0.0
    %1335 = vmatpush1.msra.mxu0 %v1255
    %1336 = vmatprep.subr.mxu0 0.0
    %1337 = vmatpush1.msra.mxu0 %v1256
    %1338 = vmatprep.subr.mxu0 0.0
    %1339 = vmatpush1.msra.mxu0 %v1257
    %1340 = vmatprep.subr.mxu0 0.0
    %1341 = vmatpush1.msra.mxu0 %v1258
    %1342 = vmatprep.subr.mxu0 0.0
    %1343 = vmatpush1.msra.mxu0 %v1259
    %1344 = vmatprep.subr.mxu0 0.0
    %1345 = vmatpush1.msra.mxu0 %v1260
    %1346 = vmatprep.subr.mxu0 0.0
    %1347 = vmatpush1.msra.mxu0 %v1261
    %1348 = vmatprep.subr.mxu0 0.0
    %1349 = vmatpush1.msra.mxu0 %v1262
    %1350 = vmatprep.subr.mxu0 0.0
    %1351 = vmatpush1.msra.mxu0 %v1263
    %1352 = vmatprep.subr.mxu0 0.0
    %1353 = vmatpush1.msra.mxu0 %v1264
    %1354 = vmatprep.subr.mxu0 0.0
    %1355 = vmatpush1.msra.mxu0 %v1265
    %1356 = vmatprep.subr.mxu0 0.0
    %1357 = vmatpush1.msra.mxu0 %v1266
    %1358 = vmatprep.subr.mxu0 0.0
    %1359 = vmatpush1.msra.mxu0 %v1267
    %1360 = vmatprep.subr.mxu0 0.0
    %1361 = vmatpush1.msra.mxu0 %v1268
    %1362 = vmatprep.subr.mxu0 0.0
    %1363 = vmatpush1.msra.mxu0 %v1269
    %1364 = vmatprep.subr.mxu0 0.0
    %1365 = vmatpush1.msra.mxu0 %v1270
    %1366 = vmatprep.subr.mxu0 0.0
    %1367 = vmatpush1.msra.mxu0 %v1271
    %1368 = vmatprep.mubr.f32.mxu0 %v1225
    %1369 = vmatmul.mubr.f32.gmra.mrb[0].mxu0 %v1224
    %v1370 = vpop.f32.mrb[0].mxu0
    %v1371 = vadd.f32 0.0, %v1370
    %v1372 = vpop.f32.mrb[0].mxu0
    %1373 = vmatprep.mubr.f32.mxu0 %v1229
    %1374 = vmatmul.mubr.f32.gmra.mrb[0].mxu0 %v1228
    %v1375 = vpop.f32.mrb[0].mxu0
    %v1376 = vadd.f32 0.0, %v1375
    %v1377 = vpop.f32.mrb[0].mxu0
    %1378 = vmatprep.mubr.f32.mxu0 %v1233
    %1379 = vmatmul.mubr.f32.gmra.mrb[0].mxu0 %v1232
    %v1380 = vpop.f32.mrb[0].mxu0
    %v1381 = vadd.f32 0.0, %v1380
    %v1382 = vpop.f32.mrb[0].mxu0
    %1383 = vmatprep.mubr.f32.mxu0 %v1237
    %1384 = vmatmul.mubr.f32.gmra.mrb[0].mxu0 %v1236
    %v1385 = vpop.f32.mrb[0].mxu0
    %v1386 = vadd.f32 0.0, %v1385
    %v1387 = vpop.f32.mrb[0].mxu0
    %1388 = vdwg.mxu0
    %1389 = vmatprep.subr.mxu0 0.0
    %1390 = vmatpush1.msra.mxu0 %v1272
    %1391 = vmatprep.subr.mxu0 0.0
    %1392 = vmatpush1.msra.mxu0 %v1273
    %1393 = vmatprep.subr.mxu0 0.0
    %1394 = vmatpush1.msra.mxu0 %v1274
    %1395 = vmatprep.subr.mxu0 0.0
    %1396 = vmatpush1.msra.mxu0 %v1275
    %1397 = vmatprep.subr.mxu0 0.0
    %1398 = vmatpush1.msra.mxu0 %v1276
    %1399 = vmatprep.subr.mxu0 0.0
    %1400 = vmatpush1.msra.mxu0 %v1277
    %1401 = vmatprep.subr.mxu0 0.0
    %1402 = vmatpush1.msra.mxu0 %v1278
    %1403 = vmatprep.subr.mxu0 0.0
    %1404 = vmatpush1.msra.mxu0 %v1279
    %1405 = vmatprep.subr.mxu0 0.0
    %1406 = vmatpush1.msra.mxu0 %v1280
    %1407 = vmatprep.subr.mxu0 0.0
    %1408 = vmatpush1.msra.mxu0 %v1281
    %1409 = vmatprep.subr.mxu0 0.0
    %1410 = vmatpush1.msra.mxu0 %v1282
    %1411 = vmatprep.subr.mxu0 0.0
    %1412 = vmatpush1.msra.mxu0 %v1283
    %1413 = vmatprep.subr.mxu0 0.0
    %1414 = vmatpush1.msra.mxu0 %v1284
    %1415 = vmatprep.subr.mxu0 0.0
    %1416 = vmatpush1.msra.mxu0 %v1285
    %1417 = vmatprep.subr.mxu0 0.0
    %1418 = vmatpush1.msra.mxu0 %v1286
    %1419 = vmatprep.subr.mxu0 0.0
    %1420 = vmatpush1.msra.mxu0 %v1287
    %1421 = vmatprep.subr.mxu0 0.0
    %1422 = vmatpush1.msra.mxu0 %v1288
    %1423 = vmatprep.subr.mxu0 0.0
    %1424 = vmatpush1.msra.mxu0 %v1289
    %1425 = vmatprep.subr.mxu0 0.0
    %1426 = vmatpush1.msra.mxu0 %v1290
    %1427 = vmatprep.subr.mxu0 0.0
    %1428 = vmatpush1.msra.mxu0 %v1291
    %1429 = vmatprep.subr.mxu0 0.0
    %1430 = vmatpush1.msra.mxu0 %v1292
    %1431 = vmatprep.subr.mxu0 0.0
    %1432 = vmatpush1.msra.mxu0 %v1293
    %1433 = vmatprep.subr.mxu0 0.0
    %1434 = vmatpush1.msra.mxu0 %v1294
    %1435 = vmatprep.subr.mxu0 0.0
    %1436 = vmatpush1.msra.mxu0 %v1295
    %1437 = vmatprep.subr.mxu0 0.0
    %1438 = vmatpush1.msra.mxu0 %v1296
    %1439 = vmatprep.subr.mxu0 0.0
    %1440 = vmatpush1.msra.mxu0 %v1297
    %1441 = vmatprep.subr.mxu0 0.0
    %1442 = vmatpush1.msra.mxu0 %v1298
    %1443 = vmatprep.subr.mxu0 0.0
    %1444 = vmatpush1.msra.mxu0 %v1299
    %1445 = vmatprep.subr.mxu0 0.0
    %1446 = vmatpush1.msra.mxu0 %v1300
    %1447 = vmatprep.subr.mxu0 0.0
    %1448 = vmatpush1.msra.mxu0 %v1301
    %1449 = vmatprep.subr.mxu0 0.0
    %1450 = vmatpush1.msra.mxu0 %v1302
    %1451 = vmatprep.subr.mxu0 0.0
    %1452 = vmatpush1.msra.mxu0 %v1303
    %1453 = vmatprep.mubr.f32.mxu0 %v1227
    %1454 = vmatmul.mubr.f32.gmra.mrb[0].mxu0 %v1226
    %v1455 = vpop.f32.mrb[0].mxu0
    %v1456 = vadd.f32 %v1371, %v1455
    %v1457 = vpop.f32.mrb[0].mxu0
    %1458 = vmatprep.mubr.f32.mxu0 %v1231
    %1459 = vmatmul.mubr.f32.gmra.mrb[0].mxu0 %v1230
    %v1460 = vpop.f32.mrb[0].mxu0
    %v1461 = vadd.f32 %v1376, %v1460
    %v1462 = vpop.f32.mrb[0].mxu0
    %1463 = vmatprep.mubr.f32.mxu0 %v1235
    %1464 = vmatmul.mubr.f32.gmra.mrb[0].mxu0 %v1234
    %v1465 = vpop.f32.mrb[0].mxu0
    %v1466 = vadd.f32 %v1381, %v1465
    %v1467 = vpop.f32.mrb[0].mxu0
    %1468 = vmatprep.mubr.f32.mxu0 %v1239
    %1469 = vmatmul.mubr.f32.gmra.mrb[0].mxu0 %v1238
    %v1470 = vpop.f32.mrb[0].mxu0
    %v1471 = vadd.f32 %v1386, %v1470
    %v1472 = vpop.f32.mrb[0].mxu0
    %1473 = vdwg.mxu0
    %v1474 = vld [vmem:[%s9] sm:$0x3]
    %v1475 = vld [vmem:[%s11] sm:$0x1]
    %v1477 = vlaneseq
    %v1478 = vshrl.u32 %v1477, 7
    %v1479 = vsub.s32 0, %v1478
    %v1480 = vrot.slane %v1475, %v1479
    %v1483 = vsel %vm57, %v1474, 0
    %1485 = vmatprep.subr.mxu0 0.0
    %1486 = vmatpush1.msra.mxu0 %v1456
    %1487 = vmatprep.subr.mxu0 0.0
    %1488 = vmatpush1.msra.mxu0 %v1461
    %1489 = vmatprep.subr.mxu0 0.0
    %1490 = vmatpush1.msra.mxu0 %v1466
    %1491 = vmatprep.subr.mxu0 0.0
    %1492 = vmatpush1.msra.mxu0 %v1471
    %1493 = vmatprep.subr.mxu0 0.0
    %1494 = vmatpush1.msra.mxu0 0.0
    %1495 = vmatprep.subr.mxu0 0.0
    %1496 = vmatpush1.msra.mxu0 0.0
    %1497 = vmatprep.subr.mxu0 0.0
    %1498 = vmatpush1.msra.mxu0 0.0
    %1499 = vmatprep.subr.mxu0 0.0
    %1500 = vmatpush1.msra.mxu0 0.0
    %1501 = vmatprep.subr.mxu0 0.0
    %1502 = vmatpush1.msra.mxu0 0.0
    %1503 = vmatprep.subr.mxu0 0.0
    %1504 = vmatpush1.msra.mxu0 0.0
    %1505 = vmatprep.subr.mxu0 0.0
    %1506 = vmatpush1.msra.mxu0 0.0
    %1507 = vmatprep.subr.mxu0 0.0
    %1508 = vmatpush1.msra.mxu0 0.0
    %1509 = vmatprep.subr.mxu0 0.0
    %1510 = vmatpush1.msra.mxu0 0.0
    %1511 = vmatprep.subr.mxu0 0.0
    %1512 = vmatpush1.msra.mxu0 0.0
    %1513 = vmatprep.subr.mxu0 0.0
    %1514 = vmatpush1.msra.mxu0 0.0
    %1515 = vmatprep.subr.mxu0 0.0
    %1516 = vmatpush1.msra.mxu0 0.0
    %1517 = vmatprep.subr.mxu0 0.0
    %1518 = vmatpush1.msra.mxu0 0.0
    %1519 = vmatprep.subr.mxu0 0.0
    %1520 = vmatpush1.msra.mxu0 0.0
    %1521 = vmatprep.subr.mxu0 0.0
    %1522 = vmatpush1.msra.mxu0 0.0
    %1523 = vmatprep.subr.mxu0 0.0
    %1524 = vmatpush1.msra.mxu0 0.0
    %1525 = vmatprep.subr.mxu0 0.0
    %1526 = vmatpush1.msra.mxu0 0.0
    %1527 = vmatprep.subr.mxu0 0.0
    %1528 = vmatpush1.msra.mxu0 0.0
    %1529 = vmatprep.subr.mxu0 0.0
    %1530 = vmatpush1.msra.mxu0 0.0
    %1531 = vmatprep.subr.mxu0 0.0
    %1532 = vmatpush1.msra.mxu0 0.0
    %1533 = vmatprep.subr.mxu0 0.0
    %1534 = vmatpush1.msra.mxu0 0.0
    %1535 = vmatprep.subr.mxu0 0.0
    %1536 = vmatpush1.msra.mxu0 0.0
    %1537 = vmatprep.subr.mxu0 0.0
    %1538 = vmatpush1.msra.mxu0 0.0
    %1539 = vmatprep.subr.mxu0 0.0
    %1540 = vmatpush1.msra.mxu0 0.0
    %1541 = vmatprep.subr.mxu0 0.0
    %1542 = vmatpush1.msra.mxu0 0.0
    %1543 = vmatprep.subr.mxu0 0.0
    %1544 = vmatpush1.msra.mxu0 0.0
    %1545 = vmatprep.subr.mxu0 0.0
    %1546 = vmatpush1.msra.mxu0 0.0
    %1547 = vmatprep.subr.mxu0 0.0
    %1548 = vmatpush1.msra.mxu0 0.0
    %1549 = vmatprep.mubr.f32.mxu0 0.0
    %1550 = vmatmul.mubr.f32.gmra.mrb[0].mxu0 %v1483
    %v1551 = vpop.f32.mrb[0].mxu0
    %v1552 = vadd.f32 %v1480, %v1551
    %v1553 = vpop.f32.mrb[0].mxu0
    %1554 = vdwg.mxu0
    %v1555 = vmax.f32 %v1552, 0.0
    %vm1556 = vcmask 254976
    %1557 = vst.msk [vmem:[#allocation2] sm:$0x3] %vm1556, %v1555
    // Predicated region
    $region50: #{encoder_last_forward.1} parent=1 // pred_check
      _
    $region51: #{encoder_last_forward.1} parent=1 // pred_check_branch
      %1559 = sbr.rel (0) target = $region53
    $region52: #{encoder_last_forward.1} parent=1 // pred_region
      %s1561 = ssub.s32 32, 32
      %1562 = vsyncadd [#allocation3], %s1561
      %s1564 = sshll.u32 [#allocation2], 4
      %s1565 = int_to_ptr.vmem [resolvable:$true] %s1564
      %1567 = dma.vmem_to_hbm [thread:$0]  %s1565, 32, %s12, [#allocation3]
    $region53: #{encoder_last_forward.1} parent=1 // pred_fallthru
      _
    // Predicated region
    $region54: #{encoder_last_forward.1} parent=1 // pred_check
      _
    $region55: #{encoder_last_forward.1} parent=1 // pred_check_branch
      %1569 = sbr.rel (0) target = $region57
    $region56: #{encoder_last_forward.1} parent=1 // pred_region
      %1570 = dma.done [#allocation3], 32
    $region57: #{encoder_last_forward.1} parent=1 // pred_fallthru
      _
    %1571 = vsyncpa [#allocation3], 1

</llo_original>
